<compile_context>
chip_gen: v6e
topology: v6e:2x2x1
jax: 0.10.0
libtpu: 0.0.40
codegen_flags: <defaults>
</compile_context>

<pallas_src>
import math

import jax
import jax.numpy as jnp
from jax.experimental import pallas as pl
from jax.experimental.pallas import tpu as pltpu


def _round_up(n, m):
    return ((n + m - 1) // m) * m


def _make_kernel(group):
    """group = #consecutive frames folded into the lane axis of the output."""

    def kernel(xrmm_ref, x_ref, wcat_ref, bcat_ref,
               w1_ref, b1_ref, w2_ref, b2_ref, wd_ref, o_ref):
        # xrmm_ref : (B,) f32 in SMEM    mean(|ref channel|) per batch element
        # x_ref    : (nmic, F_TILE, L)   framed multi-mic input tile (f32)
        # wcat_ref : (nmic, L, 2*Np)     fused [We_m | (Wr if m==0 else 0)]
        # o_ref    : (nspk, F_TILE//g, g*L) separated, framed output tile
        cdt = wcat_ref.dtype                           # MXU operand dtype
        nmic, f_tile, l_win = x_ref.shape
        n_pad = wd_ref.shape[0]
        nspk = o_ref.shape[0]

        xrmm = xrmm_ref[pl.program_id(0)]              # f32 scalar from SMEM
        inv = 1.0 / (xrmm + 1e-8)

        # ---- encoder (fused main + ref-channel): per-mic MXU dots ----------
        acc = None
        for m in range(nmic):
            xm = (x_ref[m].astype(jnp.float32) * inv).astype(cdt)
            d = jnp.dot(xm, wcat_ref[m], preferred_element_type=jnp.float32)
            acc = d if acc is None else acc + d
        enc_all = jnp.maximum(acc + bcat_ref[...], 0.0)        # (F_TILE, 2*Np)
        enc = enc_all[:, :n_pad]
        ref_enc = enc_all[:, n_pad:]

        # ---- separator: 2-layer MLP over features, sigmoid masks -----------
        h = jnp.dot(enc.astype(cdt), w1_ref[...],
                    preferred_element_type=jnp.float32)
        h = jnp.maximum(h + b1_ref[...], 0.0)                   # (F_TILE, Hp)
        logits = jnp.dot(h.astype(cdt), w2_ref[...],
                         preferred_element_type=jnp.float32)
        masks = jax.nn.sigmoid(logits + b2_ref[...])            # (F_TILE, nspk*Np)

        # ---- decoder: mask * ref_enc, matmul, inverse normalization --------
        for s in range(nspk):
            masked = (ref_enc * masks[:, s * n_pad:(s + 1) * n_pad]).astype(cdt)
            dec = jnp.dot(masked, wd_ref[...],
                          preferred_element_type=jnp.float32) * xrmm
            if group > 1:
                # Fold `group` consecutive frames into lanes: lane-dense store.
                dec = dec.reshape(f_tile // group, group * l_win)
            o_ref[s] = dec.astype(o_ref.dtype)

    return kernel


def _esd_forward(x, params, *, matmul_dtype, frame_tile_target, dense_store):
    B, nmic, T = x.shape
    L = int(params["L"])
    nspk = int(params["nspk"])
    assert T % L == 0, "T must be a multiple of the encoder kernel size L"
    F = T // L
    N = params["We"].shape[1]
    H = params["W1"].shape[1]
    assert params["We"].shape[0] == nmic * L

    # Feature / hidden dims zero-padded to lane multiples (padded features are
    # exactly zero through every stage -> semantics preserved).
    n_pad = _round_up(N, 128)
    h_pad = _round_up(H, 128)
    dN, dH = n_pad - N, h_pad - H

    # Frame grouping for the lane-dense output store.
    g = 128 // math.gcd(L, 128) if dense_store else 1
    if L % 128 == 0:
        g = 1
    unit = 8 * g                                    # f_tile granularity
    target = max(unit, (max(frame_tile_target, unit) // unit) * unit)
    f_tile = min(target, _round_up(F, unit))
    num_f_tiles = pl.cdiv(F, f_tile)                # cdiv grid, partial edge ok
    rows = f_tile // g                              # output tile sublane rows
    out_rows = num_f_tiles * rows
    lane_out = g * L

    f32 = jnp.float32
    # ---- weight prep (tiny one-off XLA ops) --------------------------------
    We = jnp.pad(params["We"].astype(f32), ((0, 0), (0, dN)))
    Wr = jnp.pad(params["Wr"].astype(f32), ((0, 0), (0, dN)))
    be = jnp.pad(params["be"].astype(f32), ((0, 0), (0, dN)))
    br = jnp.pad(params["br"].astype(f32), ((0, 0), (0, dN)))
    W1 = jnp.pad(params["W1"].astype(f32), ((0, dN), (0, dH)))
    b1 = jnp.pad(params["b1"].astype(f32), ((0, 0), (0, dH)))
    W2 = jnp.pad(params["W2"].astype(f32).reshape(H, nspk, N),
                 ((0, dH), (0, 0), (0, dN))).reshape(h_pad, nspk * n_pad)
    b2 = jnp.pad(params["b2"].astype(f32).reshape(1, nspk, N),
                 ((0, 0), (0, 0), (0, dN))).reshape(1, nspk * n_pad)
    Wd = jnp.pad(params["Wd"].astype(f32), ((0, dN), (0, 0)))

    # Fuse the ref-channel encoder into mic 0 of the per-mic encoder weights.
    We3 = We.reshape(nmic, L, n_pad)
    Wr3 = jnp.concatenate([Wr[None], jnp.zeros((nmic - 1, L, n_pad), f32)], 0)
    Wcat = jnp.concatenate([We3, Wr3], axis=-1).astype(matmul_dtype)
    bcat = jnp.concatenate([be, br], axis=-1)                  # f32 (1, 2*Np)
    W1c = W1.astype(matmul_dtype)
    W2c = W2.astype(matmul_dtype)
    Wdc = Wd.astype(matmul_dtype)

    # ---- inputs: framed view is a FREE reshape (no HBM transpose pass) -----
    x4 = x.astype(f32).reshape(B, nmic, F, L)
    xrmm = jnp.mean(jnp.abs(x[:, 0, :].astype(f32)), axis=1)   # (B,) f32

    def wspec(a):
        zeros = (0,) * a.ndim
        return pl.BlockSpec(a.shape, lambda b, f: zeros)

    in_specs = [
        pl.BlockSpec(memory_space=pltpu.MemorySpace.SMEM),          # XrMM
        pl.BlockSpec((None, nmic, f_tile, L), lambda b, f: (b, 0, f, 0)),
        wspec(Wcat), wspec(bcat), wspec(W1c), wspec(b1),
        wspec(W2c), wspec(b2), wspec(Wdc),
    ]
    out_specs = pl.BlockSpec((None, nspk, rows, lane_out),
                             lambda b, f: (b, 0, f, 0))
    out_shape = jax.ShapeDtypeStruct((B, nspk, out_rows, lane_out), f32)

    # ---- VMEM budget: lane-padded tiles + resident weights + temporaries ---
    def lanes(n):
        return _round_up(n, 128)
    wdt = jnp.dtype(matmul_dtype).itemsize
    in_tile_b = nmic * f_tile * lanes(L) * 4
    out_tile_b = nspk * rows * lanes(lane_out) * 4
    weight_b = ((Wcat.size + W1c.size + W2c.size) * wdt
                + n_pad * lanes(L) * wdt
                + 8 * (lanes(2 * n_pad) + lanes(h_pad) + lanes(nspk * n_pad)) * 4)
    inter_b = f_tile * (4 * n_pad + h_pad + nspk * n_pad) * 4 * 2
    est = 2 * (in_tile_b + out_tile_b + weight_b) + inter_b
    try:
        cap = int(getattr(pltpu.get_tpu_info(), "vmem_capacity_bytes",
                          64 * 2 ** 20))
    except Exception:
        cap = 64 * 2 ** 20
    vmem_limit = int(min(max(2 * est, 32 * 2 ** 20), (3 * cap) // 4))

    flops = 2 * B * F * (nmic * L * 2 * n_pad + n_pad * h_pad
                         + h_pad * nspk * n_pad + nspk * n_pad * L)
    bytes_accessed = (x4.size * 4 + B * nspk * out_rows * lane_out * 4
                      + int(Wcat.size + W1c.size + W2c.size + Wdc.size) * wdt
                      + int(bcat.size + b1.size + b2.size) * 4)
    cost = pl.CostEstimate(flops=int(flops),
                           transcendentals=int(B * F * nspk * n_pad),
                           bytes_accessed=int(bytes_accessed))

    out = pl.pallas_call(
        _make_kernel(g),
        out_shape=out_shape,
        grid_spec=pltpu.PrefetchScalarGridSpec(
            num_scalar_prefetch=0,
            grid=(B, num_f_tiles),
            in_specs=in_specs,
            out_specs=out_specs),
        compiler_params=pltpu.CompilerParams(
            dimension_semantics=("parallel", "parallel"),
            vmem_limit_bytes=vmem_limit),
        cost_estimate=cost,
    )(xrmm, x4, Wcat, bcat, W1c, b1, W2c, b2, Wdc)

    # Contiguous (free) flatten; trailing padded frames are sliced away
    # (no-op when F is a multiple of f_tile and of g).
    flat = out.reshape(B, nspk, out_rows * lane_out)
    return flat if out_rows * lane_out == T else flat[..., :T]


_DENSE_STORE_OK = None


def encoder_separator_decoder(x, params, *, matmul_dtype=jnp.bfloat16,
                              frame_tile_target=512):
    """x: (B, nmic, T) -> (B, nspk, T) float32."""
    global _DENSE_STORE_OK
    if _DENSE_STORE_OK is None:
        try:
            out = _esd_forward(x, params, matmul_dtype=matmul_dtype,
                               frame_tile_target=frame_tile_target,
                               dense_store=True)
            jax.block_until_ready(out)
            _DENSE_STORE_OK = True
            return out
        except Exception:
            # The lane-dense relayout (sublane->lane reshape) did not lower on
            # this toolchain: fall back to the masked-store output layout.
            _DENSE_STORE_OK = False
    return _esd_forward(x, params, matmul_dtype=matmul_dtype,
                        frame_tile_target=frame_tile_target,
                        dense_store=_DENSE_STORE_OK)


def reference_jax(x, params):
    """Pure-JAX reference with identical semantics (for verification)."""
    B, nmic, T = x.shape
    L, nspk = params["L"], params["nspk"]
    F = T // L
    xf = x.reshape(B, nmic, F, L).transpose(0, 2, 1, 3).reshape(B, F, nmic * L)
    xr = x[:, 0, :].reshape(B, F, L)
    xrmm = jnp.mean(jnp.abs(xr), axis=(1, 2), keepdims=True)
    inv = 1.0 / (xrmm + 1e-8)
    enc = jax.nn.relu(jnp.einsum("bfk,kn->bfn", xf * inv, params["We"])
                      + params["be"])
    ref_enc = jax.nn.relu(jnp.einsum("bfl,ln->bfn", xr * inv, params["Wr"])
                          + params["br"])
    h = jax.nn.relu(jnp.einsum("bfn,nh->bfh", enc, params["W1"]) + params["b1"])
    masks = jax.nn.sigmoid(jnp.einsum("bfh,hm->bfm", h, params["W2"])
                           + params["b2"])
    N = enc.shape[-1]
    outs = []
    for s in range(nspk):
        masked = ref_enc * masks[..., s * N:(s + 1) * N]
        dec = jnp.einsum("bfn,nl->bfl", masked, params["Wd"]) * xrmm
        outs.append(dec.reshape(B, T))
    return jnp.stack(outs, axis=1)


def init_params(key, nmic, L, N, H, nspk):
    ks = jax.random.split(key, 6)
    s = 0.1
    return {
        "L": L, "nspk": nspk,
        "We": s * jax.random.normal(ks[0], (nmic * L, N), jnp.float32),
        "be": jnp.zeros((1, N), jnp.float32),
        "Wr": s * jax.random.normal(ks[1], (L, N), jnp.float32),
        "br": jnp.zeros((1, N), jnp.float32),
        "W1": s * jax.random.normal(ks[2], (N, H), jnp.float32),
        "b1": jnp.zeros((1, H), jnp.float32),
        "W2": s * jax.random.normal(ks[3], (H, nspk * N), jnp.float32),
        "b2": jnp.zeros((1, nspk * N), jnp.float32),
        "Wd": s * jax.random.normal(ks[4], (N, L), jnp.float32),
    }


if __name__ == "__main__":
    # Config 1: single frame tile, exact shapes.
    B, nmic, T = 2, 4, 1024
    L, N, H, nspk = 16, 64, 64, 2

    key = jax.random.PRNGKey(0)
    kx, kp = jax.random.split(key)
    mix_audio = jax.random.normal(kx, (B, nmic, T), jnp.float32)
    params = init_params(kp, nmic, L, N, H, nspk)
    ref = jax.block_until_ready(reference_jax(mix_audio, params))

    # f32 MXU operands: tight check.
    out_f32 = jax.block_until_ready(
        encoder_separator_decoder(mix_audio, params, matmul_dtype=jnp.float32))
    assert out_f32.shape == (B, nspk, T), out_f32.shape
    assert jnp.allclose(out_f32, ref, rtol=1e-3, atol=1e-3), \
        float(jnp.max(jnp.abs(out_f32 - ref)))

    # bf16 MXU operands (default fast path), f32 accumulation: loose check.
    out_bf16 = jax.block_until_ready(
        encoder_separator_decoder(mix_audio, params))
    assert out_bf16.shape == (B, nspk, T), out_bf16.shape
    assert jnp.allclose(out_bf16, ref, rtol=7e-2, atol=7e-2), \
        float(jnp.max(jnp.abs(out_bf16 - ref)))

    # Config 2: multi-tile grid with a partial last frame tile, different L,
    # non-128 feature/hidden dims (exercises padding + cdiv paths), f32 check.
    B2, nmic2, L2, N2, H2, nspk2 = 1, 3, 8, 80, 96, 3
    T2 = L2 * 1100
    kx2, kp2 = jax.random.split(jax.random.PRNGKey(0))
    x2 = jax.random.normal(kx2, (B2, nmic2, T2), jnp.float32)
    p2 = init_params(kp2, nmic2, L2, N2, H2, nspk2)
    ref2 = jax.block_until_ready(reference_jax(x2, p2))
    out2 = jax.block_until_ready(
        encoder_separator_decoder(x2, p2, matmul_dtype=jnp.float32))
    assert out2.shape == (B2, nspk2, T2), out2.shape
    assert jnp.allclose(out2, ref2, rtol=1e-3, atol=1e-3), \
        float(jnp.max(jnp.abs(out2 - ref2)))

    print("KERNEL_OK")
</pallas_src>

<mosaic_0001>
module attributes {stable_mosaic.version = 11 : i64} {
  func.func @kernel(%arg0: i32, %arg1: i32, %arg2: memref<2xf32, #tpu.memory_space<smem>>, %arg3: memref<1x4x64x16xf32, #tpu.memory_space<vmem>>, %arg4: memref<4x16x256xf32, #tpu.memory_space<vmem>>, %arg5: memref<1x256xf32, #tpu.memory_space<vmem>>, %arg6: memref<128x128xf32, #tpu.memory_space<vmem>>, %arg7: memref<1x128xf32, #tpu.memory_space<vmem>>, %arg8: memref<128x256xf32, #tpu.memory_space<vmem>>, %arg9: memref<1x256xf32, #tpu.memory_space<vmem>>, %arg10: memref<128x16xf32, #tpu.memory_space<vmem>>, %arg11: memref<1x2x8x128xf32, #tpu.memory_space<vmem>>) attributes {dimension_semantics = [#tpu.dimension_semantics<parallel>, #tpu.dimension_semantics<parallel>], iteration_bounds = array<i64: 2, 1>, scalar_prefetch = 0 : i64, scratch_operands = 0 : i64, tpu.core_type = #tpu.core_type<tc>, window_params = [{transform_indices = @transform_0, window_bounds = array<i64: 2>}, {transform_indices = @transform_1, window_bounds = array<i64: 1, 4, 64, 16>}, {pipeline_mode = #tpu.pipeline_mode<synchronous>, transform_indices = @transform_2, window_bounds = array<i64: 4, 16, 256>}, {pipeline_mode = #tpu.pipeline_mode<synchronous>, transform_indices = @transform_3, window_bounds = array<i64: 1, 256>}, {pipeline_mode = #tpu.pipeline_mode<synchronous>, transform_indices = @transform_4, window_bounds = array<i64: 128, 128>}, {pipeline_mode = #tpu.pipeline_mode<synchronous>, transform_indices = @transform_5, window_bounds = array<i64: 1, 128>}, {pipeline_mode = #tpu.pipeline_mode<synchronous>, transform_indices = @transform_6, window_bounds = array<i64: 128, 256>}, {pipeline_mode = #tpu.pipeline_mode<synchronous>, transform_indices = @transform_7, window_bounds = array<i64: 1, 256>}, {pipeline_mode = #tpu.pipeline_mode<synchronous>, transform_indices = @transform_8, window_bounds = array<i64: 128, 16>}, {transform_indices = @transform_9, window_bounds = array<i64: 1, 2, 8, 128>}]} {
    %0 = arith.index_cast %arg0 : i32 to index
    %1 = memref.load %arg2[%0] : memref<2xf32, #tpu.memory_space<smem>>
    %cst = arith.constant 9.99999993E-9 : f32
    %2 = arith.addf %1, %cst : f32
    %cst_0 = arith.constant 1.000000e+00 : f32
    %3 = arith.divf %cst_0, %2 : f32
    %c0 = arith.constant 0 : index
    %c0_1 = arith.constant 0 : index
    %c0_2 = arith.constant 0 : index
    %c0_3 = arith.constant 0 : index
    %4 = vector.load %arg3[%c0, %c0_1, %c0_2, %c0_3] : memref<1x4x64x16xf32, #tpu.memory_space<vmem>>, vector<1x1x64x16xf32>
    %5 = vector.shape_cast %4 : vector<1x1x64x16xf32> to vector<64x16xf32>
    %6 = vector.broadcast %3 : f32 to vector<64x16xf32>
    %7 = arith.mulf %5, %6 : vector<64x16xf32>
    %c0_4 = arith.constant 0 : index
    %c0_5 = arith.constant 0 : index
    %c0_6 = arith.constant 0 : index
    %8 = vector.load %arg4[%c0_4, %c0_5, %c0_6] : memref<4x16x256xf32, #tpu.memory_space<vmem>>, vector<1x16x256xf32>
    %9 = vector.shape_cast %8 : vector<1x16x256xf32> to vector<16x256xf32>
    %cst_7 = arith.constant dense<0.000000e+00> : vector<64x256xf32>
    %10 = tpu.matmul %7, %9, %cst_7 {dimension_numbers = #tpu.dot_dimension_numbers<[1], [0], [0], [1], [0, 0, 1, 1], [], []>} : vector<64x16xf32>, vector<16x256xf32>, vector<64x256xf32> -> vector<64x256xf32>
    %c0_8 = arith.constant 0 : index
    %c1 = arith.constant 1 : index
    %c0_9 = arith.constant 0 : index
    %c0_10 = arith.constant 0 : index
    %11 = vector.load %arg3[%c0_8, %c1, %c0_9, %c0_10] : memref<1x4x64x16xf32, #tpu.memory_space<vmem>>, vector<1x1x64x16xf32>
    %12 = vector.shape_cast %11 : vector<1x1x64x16xf32> to vector<64x16xf32>
    %13 = vector.broadcast %3 : f32 to vector<64x16xf32>
    %14 = arith.mulf %12, %13 : vector<64x16xf32>
    %c1_11 = arith.constant 1 : index
    %c0_12 = arith.constant 0 : index
    %c0_13 = arith.constant 0 : index
    %15 = vector.load %arg4[%c1_11, %c0_12, %c0_13] : memref<4x16x256xf32, #tpu.memory_space<vmem>>, vector<1x16x256xf32>
    %16 = vector.shape_cast %15 : vector<1x16x256xf32> to vector<16x256xf32>
    %cst_14 = arith.constant dense<0.000000e+00> : vector<64x256xf32>
    %17 = tpu.matmul %14, %16, %cst_14 {dimension_numbers = #tpu.dot_dimension_numbers<[1], [0], [0], [1], [0, 0, 1, 1], [], []>} : vector<64x16xf32>, vector<16x256xf32>, vector<64x256xf32> -> vector<64x256xf32>
    %18 = arith.addf %10, %17 : vector<64x256xf32>
    %c0_15 = arith.constant 0 : index
    %c2 = arith.constant 2 : index
    %c0_16 = arith.constant 0 : index
    %c0_17 = arith.constant 0 : index
    %19 = vector.load %arg3[%c0_15, %c2, %c0_16, %c0_17] : memref<1x4x64x16xf32, #tpu.memory_space<vmem>>, vector<1x1x64x16xf32>
    %20 = vector.shape_cast %19 : vector<1x1x64x16xf32> to vector<64x16xf32>
    %21 = vector.broadcast %3 : f32 to vector<64x16xf32>
    %22 = arith.mulf %20, %21 : vector<64x16xf32>
    %c2_18 = arith.constant 2 : index
    %c0_19 = arith.constant 0 : index
    %c0_20 = arith.constant 0 : index
    %23 = vector.load %arg4[%c2_18, %c0_19, %c0_20] : memref<4x16x256xf32, #tpu.memory_space<vmem>>, vector<1x16x256xf32>
    %24 = vector.shape_cast %23 : vector<1x16x256xf32> to vector<16x256xf32>
    %cst_21 = arith.constant dense<0.000000e+00> : vector<64x256xf32>
    %25 = tpu.matmul %22, %24, %cst_21 {dimension_numbers = #tpu.dot_dimension_numbers<[1], [0], [0], [1], [0, 0, 1, 1], [], []>} : vector<64x16xf32>, vector<16x256xf32>, vector<64x256xf32> -> vector<64x256xf32>
    %26 = arith.addf %18, %25 : vector<64x256xf32>
    %c0_22 = arith.constant 0 : index
    %c3 = arith.constant 3 : index
    %c0_23 = arith.constant 0 : index
    %c0_24 = arith.constant 0 : index
    %27 = vector.load %arg3[%c0_22, %c3, %c0_23, %c0_24] : memref<1x4x64x16xf32, #tpu.memory_space<vmem>>, vector<1x1x64x16xf32>
    %28 = vector.shape_cast %27 : vector<1x1x64x16xf32> to vector<64x16xf32>
    %29 = vector.broadcast %3 : f32 to vector<64x16xf32>
    %30 = arith.mulf %28, %29 : vector<64x16xf32>
    %c3_25 = arith.constant 3 : index
    %c0_26 = arith.constant 0 : index
    %c0_27 = arith.constant 0 : index
    %31 = vector.load %arg4[%c3_25, %c0_26, %c0_27] : memref<4x16x256xf32, #tpu.memory_space<vmem>>, vector<1x16x256xf32>
    %32 = vector.shape_cast %31 : vector<1x16x256xf32> to vector<16x256xf32>
    %cst_28 = arith.constant dense<0.000000e+00> : vector<64x256xf32>
    %33 = tpu.matmul %30, %32, %cst_28 {dimension_numbers = #tpu.dot_dimension_numbers<[1], [0], [0], [1], [0, 0, 1, 1], [], []>} : vector<64x16xf32>, vector<16x256xf32>, vector<64x256xf32> -> vector<64x256xf32>
    %34 = arith.addf %26, %33 : vector<64x256xf32>
    %c0_29 = arith.constant 0 : index
    %c0_30 = arith.constant 0 : index
    %35 = vector.load %arg5[%c0_29, %c0_30] : memref<1x256xf32, #tpu.memory_space<vmem>>, vector<1x256xf32>
    %36 = vector.broadcast %35 : vector<1x256xf32> to vector<64x256xf32>
    %37 = arith.addf %34, %36 : vector<64x256xf32>
    %cst_31 = arith.constant 0.000000e+00 : f32
    %38 = vector.broadcast %cst_31 : f32 to vector<64x256xf32>
    %39 = arith.maximumf %37, %38 : vector<64x256xf32>
    %40 = vector.extract_strided_slice %39 {offsets = [0, 0], sizes = [64, 128], strides = [1, 1]} : vector<64x256xf32> to vector<64x128xf32>
    %41 = vector.extract_strided_slice %39 {offsets = [0, 128], sizes = [64, 128], strides = [1, 1]} : vector<64x256xf32> to vector<64x128xf32>
    %c0_32 = arith.constant 0 : index
    %c0_33 = arith.constant 0 : index
    %42 = vector.load %arg6[%c0_32, %c0_33] : memref<128x128xf32, #tpu.memory_space<vmem>>, vector<128x128xf32>
    %cst_34 = arith.constant dense<0.000000e+00> : vector<64x128xf32>
    %43 = tpu.matmul %40, %42, %cst_34 {dimension_numbers = #tpu.dot_dimension_numbers<[1], [0], [0], [1], [0, 0, 1, 1], [], []>} : vector<64x128xf32>, vector<128x128xf32>, vector<64x128xf32> -> vector<64x128xf32>
    %c0_35 = arith.constant 0 : index
    %c0_36 = arith.constant 0 : index
    %44 = vector.load %arg7[%c0_35, %c0_36] : memref<1x128xf32, #tpu.memory_space<vmem>>, vector<1x128xf32>
    %45 = vector.broadcast %44 : vector<1x128xf32> to vector<64x128xf32>
    %46 = arith.addf %43, %45 : vector<64x128xf32>
    %cst_37 = arith.constant 0.000000e+00 : f32
    %47 = vector.broadcast %cst_37 : f32 to vector<64x128xf32>
    %48 = arith.maximumf %46, %47 : vector<64x128xf32>
    %c0_38 = arith.constant 0 : index
    %c0_39 = arith.constant 0 : index
    %49 = vector.load %arg8[%c0_38, %c0_39] : memref<128x256xf32, #tpu.memory_space<vmem>>, vector<128x256xf32>
    %cst_40 = arith.constant dense<0.000000e+00> : vector<64x256xf32>
    %50 = tpu.matmul %48, %49, %cst_40 {dimension_numbers = #tpu.dot_dimension_numbers<[1], [0], [0], [1], [0, 0, 1, 1], [], []>} : vector<64x128xf32>, vector<128x256xf32>, vector<64x256xf32> -> vector<64x256xf32>
    %c0_41 = arith.constant 0 : index
    %c0_42 = arith.constant 0 : index
    %51 = vector.load %arg9[%c0_41, %c0_42] : memref<1x256xf32, #tpu.memory_space<vmem>>, vector<1x256xf32>
    %52 = vector.broadcast %51 : vector<1x256xf32> to vector<64x256xf32>
    %53 = arith.addf %50, %52 : vector<64x256xf32>
    %54 = arith.negf %53 : vector<64x256xf32>
    %55 = math.exp %54 : vector<64x256xf32>
    %cst_43 = arith.constant 1.000000e+00 : f32
    %56 = vector.broadcast %cst_43 : f32 to vector<64x256xf32>
    %57 = arith.addf %56, %55 : vector<64x256xf32>
    %58 = arith.divf %56, %57 : vector<64x256xf32>
    %59 = vector.extract_strided_slice %58 {offsets = [0, 0], sizes = [64, 128], strides = [1, 1]} : vector<64x256xf32> to vector<64x128xf32>
    %60 = arith.mulf %41, %59 : vector<64x128xf32>
    %c0_44 = arith.constant 0 : index
    %c0_45 = arith.constant 0 : index
    %61 = vector.load %arg10[%c0_44, %c0_45] : memref<128x16xf32, #tpu.memory_space<vmem>>, vector<128x16xf32>
    %cst_46 = arith.constant dense<0.000000e+00> : vector<64x16xf32>
    %62 = tpu.matmul %60, %61, %cst_46 {dimension_numbers = #tpu.dot_dimension_numbers<[1], [0], [0], [1], [0, 0, 1, 1], [], []>} : vector<64x128xf32>, vector<128x16xf32>, vector<64x16xf32> -> vector<64x16xf32>
    %63 = vector.broadcast %1 : f32 to vector<64x16xf32>
    %64 = arith.mulf %62, %63 : vector<64x16xf32>
    %65 = vector.shape_cast %64 : vector<64x16xf32> to vector<8x128xf32>
    %c0_47 = arith.constant 0 : index
    %c0_48 = arith.constant 0 : index
    %c0_49 = arith.constant 0 : index
    %c0_50 = arith.constant 0 : index
    %66 = vector.load %arg11[%c0_47, %c0_48, %c0_49, %c0_50] : memref<1x2x8x128xf32, #tpu.memory_space<vmem>>, vector<1x1x8x128xf32>
    %67 = vector.shape_cast %66 : vector<1x1x8x128xf32> to vector<8x128xf32>
    %68 = vector.shape_cast %65 : vector<8x128xf32> to vector<1x1x8x128xf32>
    tpu.vector_store %arg11[%c0_47, %c0_48, %c0_49, %c0_50], %68 {strides = array<i32>} : memref<1x2x8x128xf32, #tpu.memory_space<vmem>>, vector<1x1x8x128xf32>,
    %69 = vector.extract_strided_slice %58 {offsets = [0, 128], sizes = [64, 128], strides = [1, 1]} : vector<64x256xf32> to vector<64x128xf32>
    %70 = arith.mulf %41, %69 : vector<64x128xf32>
    %c0_51 = arith.constant 0 : index
    %c0_52 = arith.constant 0 : index
    %71 = vector.load %arg10[%c0_51, %c0_52] : memref<128x16xf32, #tpu.memory_space<vmem>>, vector<128x16xf32>
    %cst_53 = arith.constant dense<0.000000e+00> : vector<64x16xf32>
    %72 = tpu.matmul %70, %71, %cst_53 {dimension_numbers = #tpu.dot_dimension_numbers<[1], [0], [0], [1], [0, 0, 1, 1], [], []>} : vector<64x128xf32>, vector<128x16xf32>, vector<64x16xf32> -> vector<64x16xf32>
    %73 = vector.broadcast %1 : f32 to vector<64x16xf32>
    %74 = arith.mulf %72, %73 : vector<64x16xf32>
    %75 = vector.shape_cast %74 : vector<64x16xf32> to vector<8x128xf32>
    %c0_54 = arith.constant 0 : index
    %c1_55 = arith.constant 1 : index
    %c0_56 = arith.constant 0 : index
    %c0_57 = arith.constant 0 : index
    %76 = vector.load %arg11[%c0_54, %c1_55, %c0_56, %c0_57] : memref<1x2x8x128xf32, #tpu.memory_space<vmem>>, vector<1x1x8x128xf32>
    %77 = vector.shape_cast %76 : vector<1x1x8x128xf32> to vector<8x128xf32>
    %78 = vector.shape_cast %75 : vector<8x128xf32> to vector<1x1x8x128xf32>
    tpu.vector_store %arg11[%c0_54, %c1_55, %c0_56, %c0_57], %78 {strides = array<i32>} : memref<1x2x8x128xf32, #tpu.memory_space<vmem>>, vector<1x1x8x128xf32>,
    return
  }
  func.func @transform_0(%arg0: i32, %arg1: i32) -> i32 {
    %c0_i32 = arith.constant 0 : i32
    %c0_i32_0 = arith.constant 0 : i32
    return %c0_i32 : i32
  }
  func.func @transform_1(%arg0: i32, %arg1: i32) -> (i32, i32, i32, i32) {
    %c0_i32 = arith.constant 0 : i32
    %c0_i32_0 = arith.constant 0 : i32
    %c0_i32_1 = arith.constant 0 : i32
    return %arg0, %c0_i32, %arg1, %c0_i32_0 : i32, i32, i32, i32
  }
  func.func @transform_2(%arg0: i32, %arg1: i32) -> (i32, i32, i32) {
    %c0_i32 = arith.constant 0 : i32
    %c0_i32_0 = arith.constant 0 : i32
    %c0_i32_1 = arith.constant 0 : i32
    %c0_i32_2 = arith.constant 0 : i32
    return %c0_i32, %c0_i32_0, %c0_i32_1 : i32, i32, i32
  }
  func.func @transform_3(%arg0: i32, %arg1: i32) -> (i32, i32) {
    %c0_i32 = arith.constant 0 : i32
    %c0_i32_0 = arith.constant 0 : i32
    %c0_i32_1 = arith.constant 0 : i32
    return %c0_i32, %c0_i32_0 : i32, i32
  }
  func.func @transform_4(%arg0: i32, %arg1: i32) -> (i32, i32) {
    %c0_i32 = arith.constant 0 : i32
    %c0_i32_0 = arith.constant 0 : i32
    %c0_i32_1 = arith.constant 0 : i32
    return %c0_i32, %c0_i32_0 : i32, i32
  }
  func.func @transform_5(%arg0: i32, %arg1: i32) -> (i32, i32) {
    %c0_i32 = arith.constant 0 : i32
    %c0_i32_0 = arith.constant 0 : i32
    %c0_i32_1 = arith.constant 0 : i32
    return %c0_i32, %c0_i32_0 : i32, i32
  }
  func.func @transform_6(%arg0: i32, %arg1: i32) -> (i32, i32) {
    %c0_i32 = arith.constant 0 : i32
    %c0_i32_0 = arith.constant 0 : i32
    %c0_i32_1 = arith.constant 0 : i32
    return %c0_i32, %c0_i32_0 : i32, i32
  }
  func.func @transform_7(%arg0: i32, %arg1: i32) -> (i32, i32) {
    %c0_i32 = arith.constant 0 : i32
    %c0_i32_0 = arith.constant 0 : i32
    %c0_i32_1 = arith.constant 0 : i32
    return %c0_i32, %c0_i32_0 : i32, i32
  }
  func.func @transform_8(%arg0: i32, %arg1: i32) -> (i32, i32) {
    %c0_i32 = arith.constant 0 : i32
    %c0_i32_0 = arith.constant 0 : i32
    %c0_i32_1 = arith.constant 0 : i32
    return %c0_i32, %c0_i32_0 : i32, i32
  }
  func.func @transform_9(%arg0: i32, %arg1: i32) -> (i32, i32, i32, i32) {
    %c0_i32 = arith.constant 0 : i32
    %c0_i32_0 = arith.constant 0 : i32
    %c0_i32_1 = arith.constant 0 : i32
    return %arg0, %c0_i32, %arg1, %c0_i32_0 : i32, i32, i32, i32
  }
}

module attributes {stable_mosaic.version = 11 : i64} {
  func.func @kernel(%arg0: i32, %arg1: i32, %arg2: memref<2xf32, #tpu.memory_space<smem>>, %arg3: memref<1x4x64x16xf32, #tpu.memory_space<vmem>>, %arg4: memref<4x16x256xf32, #tpu.memory_space<vmem>>, %arg5: memref<1x256xf32, #tpu.memory_space<vmem>>, %arg6: memref<128x128xf32, #tpu.memory_space<vmem>>, %arg7: memref<1x128xf32, #tpu.memory_space<vmem>>, %arg8: memref<128x256xf32, #tpu.memory_space<vmem>>, %arg9: memref<1x256xf32, #tpu.memory_space<vmem>>, %arg10: memref<128x16xf32, #tpu.memory_space<vmem>>, %arg11: memref<1x2x64x16xf32, #tpu.memory_space<vmem>>) attributes {dimension_semantics = [#tpu.dimension_semantics<parallel>, #tpu.dimension_semantics<parallel>], iteration_bounds = array<i64: 2, 1>, scalar_prefetch = 0 : i64, scratch_operands = 0 : i64, tpu.core_type = #tpu.core_type<tc>, window_params = [{transform_indices = @transform_0, window_bounds = array<i64: 2>}, {transform_indices = @transform_1, window_bounds = array<i64: 1, 4, 64, 16>}, {pipeline_mode = #tpu.pipeline_mode<synchronous>, transform_indices = @transform_2, window_bounds = array<i64: 4, 16, 256>}, {pipeline_mode = #tpu.pipeline_mode<synchronous>, transform_indices = @transform_3, window_bounds = array<i64: 1, 256>}, {pipeline_mode = #tpu.pipeline_mode<synchronous>, transform_indices = @transform_4, window_bounds = array<i64: 128, 128>}, {pipeline_mode = #tpu.pipeline_mode<synchronous>, transform_indices = @transform_5, window_bounds = array<i64: 1, 128>}, {pipeline_mode = #tpu.pipeline_mode<synchronous>, transform_indices = @transform_6, window_bounds = array<i64: 128, 256>}, {pipeline_mode = #tpu.pipeline_mode<synchronous>, transform_indices = @transform_7, window_bounds = array<i64: 1, 256>}, {pipeline_mode = #tpu.pipeline_mode<synchronous>, transform_indices = @transform_8, window_bounds = array<i64: 128, 16>}, {transform_indices = @transform_9, window_bounds = array<i64: 1, 2, 64, 16>}]} {
    %0 = arith.index_cast %arg0 : i32 to index
    %1 = memref.load %arg2[%0] : memref<2xf32, #tpu.memory_space<smem>>
    %cst = arith.constant 9.99999993E-9 : f32
    %2 = arith.addf %1, %cst : f32
    %cst_0 = arith.constant 1.000000e+00 : f32
    %3 = arith.divf %cst_0, %2 : f32
    %c0 = arith.constant 0 : index
    %c0_1 = arith.constant 0 : index
    %c0_2 = arith.constant 0 : index
    %c0_3 = arith.constant 0 : index
    %4 = vector.load %arg3[%c0, %c0_1, %c0_2, %c0_3] : memref<1x4x64x16xf32, #tpu.memory_space<vmem>>, vector<1x1x64x16xf32>
    %5 = vector.shape_cast %4 : vector<1x1x64x16xf32> to vector<64x16xf32>
    %6 = vector.broadcast %3 : f32 to vector<64x16xf32>
    %7 = arith.mulf %5, %6 : vector<64x16xf32>
    %c0_4 = arith.constant 0 : index
    %c0_5 = arith.constant 0 : index
    %c0_6 = arith.constant 0 : index
    %8 = vector.load %arg4[%c0_4, %c0_5, %c0_6] : memref<4x16x256xf32, #tpu.memory_space<vmem>>, vector<1x16x256xf32>
    %9 = vector.shape_cast %8 : vector<1x16x256xf32> to vector<16x256xf32>
    %cst_7 = arith.constant dense<0.000000e+00> : vector<64x256xf32>
    %10 = tpu.matmul %7, %9, %cst_7 {dimension_numbers = #tpu.dot_dimension_numbers<[1], [0], [0], [1], [0, 0, 1, 1], [], []>} : vector<64x16xf32>, vector<16x256xf32>, vector<64x256xf32> -> vector<64x256xf32>
    %c0_8 = arith.constant 0 : index
    %c1 = arith.constant 1 : index
    %c0_9 = arith.constant 0 : index
    %c0_10 = arith.constant 0 : index
    %11 = vector.load %arg3[%c0_8, %c1, %c0_9, %c0_10] : memref<1x4x64x16xf32, #tpu.memory_space<vmem>>, vector<1x1x64x16xf32>
    %12 = vector.shape_cast %11 : vector<1x1x64x16xf32> to vector<64x16xf32>
    %13 = vector.broadcast %3 : f32 to vector<64x16xf32>
    %14 = arith.mulf %12, %13 : vector<64x16xf32>
    %c1_11 = arith.constant 1 : index
    %c0_12 = arith.constant 0 : index
    %c0_13 = arith.constant 0 : index
    %15 = vector.load %arg4[%c1_11, %c0_12, %c0_13] : memref<4x16x256xf32, #tpu.memory_space<vmem>>, vector<1x16x256xf32>
    %16 = vector.shape_cast %15 : vector<1x16x256xf32> to vector<16x256xf32>
    %cst_14 = arith.constant dense<0.000000e+00> : vector<64x256xf32>
    %17 = tpu.matmul %14, %16, %cst_14 {dimension_numbers = #tpu.dot_dimension_numbers<[1], [0], [0], [1], [0, 0, 1, 1], [], []>} : vector<64x16xf32>, vector<16x256xf32>, vector<64x256xf32> -> vector<64x256xf32>
    %18 = arith.addf %10, %17 : vector<64x256xf32>
    %c0_15 = arith.constant 0 : index
    %c2 = arith.constant 2 : index
    %c0_16 = arith.constant 0 : index
    %c0_17 = arith.constant 0 : index
    %19 = vector.load %arg3[%c0_15, %c2, %c0_16, %c0_17] : memref<1x4x64x16xf32, #tpu.memory_space<vmem>>, vector<1x1x64x16xf32>
    %20 = vector.shape_cast %19 : vector<1x1x64x16xf32> to vector<64x16xf32>
    %21 = vector.broadcast %3 : f32 to vector<64x16xf32>
    %22 = arith.mulf %20, %21 : vector<64x16xf32>
    %c2_18 = arith.constant 2 : index
    %c0_19 = arith.constant 0 : index
    %c0_20 = arith.constant 0 : index
    %23 = vector.load %arg4[%c2_18, %c0_19, %c0_20] : memref<4x16x256xf32, #tpu.memory_space<vmem>>, vector<1x16x256xf32>
    %24 = vector.shape_cast %23 : vector<1x16x256xf32> to vector<16x256xf32>
    %cst_21 = arith.constant dense<0.000000e+00> : vector<64x256xf32>
    %25 = tpu.matmul %22, %24, %cst_21 {dimension_numbers = #tpu.dot_dimension_numbers<[1], [0], [0], [1], [0, 0, 1, 1], [], []>} : vector<64x16xf32>, vector<16x256xf32>, vector<64x256xf32> -> vector<64x256xf32>
    %26 = arith.addf %18, %25 : vector<64x256xf32>
    %c0_22 = arith.constant 0 : index
    %c3 = arith.constant 3 : index
    %c0_23 = arith.constant 0 : index
    %c0_24 = arith.constant 0 : index
    %27 = vector.load %arg3[%c0_22, %c3, %c0_23, %c0_24] : memref<1x4x64x16xf32, #tpu.memory_space<vmem>>, vector<1x1x64x16xf32>
    %28 = vector.shape_cast %27 : vector<1x1x64x16xf32> to vector<64x16xf32>
    %29 = vector.broadcast %3 : f32 to vector<64x16xf32>
    %30 = arith.mulf %28, %29 : vector<64x16xf32>
    %c3_25 = arith.constant 3 : index
    %c0_26 = arith.constant 0 : index
    %c0_27 = arith.constant 0 : index
    %31 = vector.load %arg4[%c3_25, %c0_26, %c0_27] : memref<4x16x256xf32, #tpu.memory_space<vmem>>, vector<1x16x256xf32>
    %32 = vector.shape_cast %31 : vector<1x16x256xf32> to vector<16x256xf32>
    %cst_28 = arith.constant dense<0.000000e+00> : vector<64x256xf32>
    %33 = tpu.matmul %30, %32, %cst_28 {dimension_numbers = #tpu.dot_dimension_numbers<[1], [0], [0], [1], [0, 0, 1, 1], [], []>} : vector<64x16xf32>, vector<16x256xf32>, vector<64x256xf32> -> vector<64x256xf32>
    %34 = arith.addf %26, %33 : vector<64x256xf32>
    %c0_29 = arith.constant 0 : index
    %c0_30 = arith.constant 0 : index
    %35 = vector.load %arg5[%c0_29, %c0_30] : memref<1x256xf32, #tpu.memory_space<vmem>>, vector<1x256xf32>
    %36 = vector.broadcast %35 : vector<1x256xf32> to vector<64x256xf32>
    %37 = arith.addf %34, %36 : vector<64x256xf32>
    %cst_31 = arith.constant 0.000000e+00 : f32
    %38 = vector.broadcast %cst_31 : f32 to vector<64x256xf32>
    %39 = arith.maximumf %37, %38 : vector<64x256xf32>
    %40 = vector.extract_strided_slice %39 {offsets = [0, 0], sizes = [64, 128], strides = [1, 1]} : vector<64x256xf32> to vector<64x128xf32>
    %41 = vector.extract_strided_slice %39 {offsets = [0, 128], sizes = [64, 128], strides = [1, 1]} : vector<64x256xf32> to vector<64x128xf32>
    %c0_32 = arith.constant 0 : index
    %c0_33 = arith.constant 0 : index
    %42 = vector.load %arg6[%c0_32, %c0_33] : memref<128x128xf32, #tpu.memory_space<vmem>>, vector<128x128xf32>
    %cst_34 = arith.constant dense<0.000000e+00> : vector<64x128xf32>
    %43 = tpu.matmul %40, %42, %cst_34 {dimension_numbers = #tpu.dot_dimension_numbers<[1], [0], [0], [1], [0, 0, 1, 1], [], []>} : vector<64x128xf32>, vector<128x128xf32>, vector<64x128xf32> -> vector<64x128xf32>
    %c0_35 = arith.constant 0 : index
    %c0_36 = arith.constant 0 : index
    %44 = vector.load %arg7[%c0_35, %c0_36] : memref<1x128xf32, #tpu.memory_space<vmem>>, vector<1x128xf32>
    %45 = vector.broadcast %44 : vector<1x128xf32> to vector<64x128xf32>
    %46 = arith.addf %43, %45 : vector<64x128xf32>
    %cst_37 = arith.constant 0.000000e+00 : f32
    %47 = vector.broadcast %cst_37 : f32 to vector<64x128xf32>
    %48 = arith.maximumf %46, %47 : vector<64x128xf32>
    %c0_38 = arith.constant 0 : index
    %c0_39 = arith.constant 0 : index
    %49 = vector.load %arg8[%c0_38, %c0_39] : memref<128x256xf32, #tpu.memory_space<vmem>>, vector<128x256xf32>
    %cst_40 = arith.constant dense<0.000000e+00> : vector<64x256xf32>
    %50 = tpu.matmul %48, %49, %cst_40 {dimension_numbers = #tpu.dot_dimension_numbers<[1], [0], [0], [1], [0, 0, 1, 1], [], []>} : vector<64x128xf32>, vector<128x256xf32>, vector<64x256xf32> -> vector<64x256xf32>
    %c0_41 = arith.constant 0 : index
    %c0_42 = arith.constant 0 : index
    %51 = vector.load %arg9[%c0_41, %c0_42] : memref<1x256xf32, #tpu.memory_space<vmem>>, vector<1x256xf32>
    %52 = vector.broadcast %51 : vector<1x256xf32> to vector<64x256xf32>
    %53 = arith.addf %50, %52 : vector<64x256xf32>
    %54 = arith.negf %53 : vector<64x256xf32>
    %55 = math.exp %54 : vector<64x256xf32>
    %cst_43 = arith.constant 1.000000e+00 : f32
    %56 = vector.broadcast %cst_43 : f32 to vector<64x256xf32>
    %57 = arith.addf %56, %55 : vector<64x256xf32>
    %58 = arith.divf %56, %57 : vector<64x256xf32>
    %59 = vector.extract_strided_slice %58 {offsets = [0, 0], sizes = [64, 128], strides = [1, 1]} : vector<64x256xf32> to vector<64x128xf32>
    %60 = arith.mulf %41, %59 : vector<64x128xf32>
    %c0_44 = arith.constant 0 : index
    %c0_45 = arith.constant 0 : index
    %61 = vector.load %arg10[%c0_44, %c0_45] : memref<128x16xf32, #tpu.memory_space<vmem>>, vector<128x16xf32>
    %cst_46 = arith.constant dense<0.000000e+00> : vector<64x16xf32>
    %62 = tpu.matmul %60, %61, %cst_46 {dimension_numbers = #tpu.dot_dimension_numbers<[1], [0], [0], [1], [0, 0, 1, 1], [], []>} : vector<64x128xf32>, vector<128x16xf32>, vector<64x16xf32> -> vector<64x16xf32>
    %63 = vector.broadcast %1 : f32 to vector<64x16xf32>
    %64 = arith.mulf %62, %63 : vector<64x16xf32>
    %c0_47 = arith.constant 0 : index
    %c0_48 = arith.constant 0 : index
    %c0_49 = arith.constant 0 : index
    %c0_50 = arith.constant 0 : index
    %65 = vector.load %arg11[%c0_47, %c0_48, %c0_49, %c0_50] : memref<1x2x64x16xf32, #tpu.memory_space<vmem>>, vector<1x1x64x16xf32>
    %66 = vector.shape_cast %65 : vector<1x1x64x16xf32> to vector<64x16xf32>
    %67 = vector.shape_cast %64 : vector<64x16xf32> to vector<1x1x64x16xf32>
    tpu.vector_store %arg11[%c0_47, %c0_48, %c0_49, %c0_50], %67 {strides = array<i32>} : memref<1x2x64x16xf32, #tpu.memory_space<vmem>>, vector<1x1x64x16xf32>,
    %68 = vector.extract_strided_slice %58 {offsets = [0, 128], sizes = [64, 128], strides = [1, 1]} : vector<64x256xf32> to vector<64x128xf32>
    %69 = arith.mulf %41, %68 : vector<64x128xf32>
    %c0_51 = arith.constant 0 : index
    %c0_52 = arith.constant 0 : index
    %70 = vector.load %arg10[%c0_51, %c0_52] : memref<128x16xf32, #tpu.memory_space<vmem>>, vector<128x16xf32>
    %cst_53 = arith.constant dense<0.000000e+00> : vector<64x16xf32>
    %71 = tpu.matmul %69, %70, %cst_53 {dimension_numbers = #tpu.dot_dimension_numbers<[1], [0], [0], [1], [0, 0, 1, 1], [], []>} : vector<64x128xf32>, vector<128x16xf32>, vector<64x16xf32> -> vector<64x16xf32>
    %72 = vector.broadcast %1 : f32 to vector<64x16xf32>
    %73 = arith.mulf %71, %72 : vector<64x16xf32>
    %c0_54 = arith.constant 0 : index
    %c1_55 = arith.constant 1 : index
    %c0_56 = arith.constant 0 : index
    %c0_57 = arith.constant 0 : index
    %74 = vector.load %arg11[%c0_54, %c1_55, %c0_56, %c0_57] : memref<1x2x64x16xf32, #tpu.memory_space<vmem>>, vector<1x1x64x16xf32>
    %75 = vector.shape_cast %74 : vector<1x1x64x16xf32> to vector<64x16xf32>
    %76 = vector.shape_cast %73 : vector<64x16xf32> to vector<1x1x64x16xf32>
    tpu.vector_store %arg11[%c0_54, %c1_55, %c0_56, %c0_57], %76 {strides = array<i32>} : memref<1x2x64x16xf32, #tpu.memory_space<vmem>>, vector<1x1x64x16xf32>,
    return
  }
  func.func @transform_0(%arg0: i32, %arg1: i32) -> i32 {
    %c0_i32 = arith.constant 0 : i32
    %c0_i32_0 = arith.constant 0 : i32
    return %c0_i32 : i32
  }
  func.func @transform_1(%arg0: i32, %arg1: i32) -> (i32, i32, i32, i32) {
    %c0_i32 = arith.constant 0 : i32
    %c0_i32_0 = arith.constant 0 : i32
    %c0_i32_1 = arith.constant 0 : i32
    return %arg0, %c0_i32, %arg1, %c0_i32_0 : i32, i32, i32, i32
  }
  func.func @transform_2(%arg0: i32, %arg1: i32) -> (i32, i32, i32) {
    %c0_i32 = arith.constant 0 : i32
    %c0_i32_0 = arith.constant 0 : i32
    %c0_i32_1 = arith.constant 0 : i32
    %c0_i32_2 = arith.constant 0 : i32
    return %c0_i32, %c0_i32_0, %c0_i32_1 : i32, i32, i32
  }
  func.func @transform_3(%arg0: i32, %arg1: i32) -> (i32, i32) {
    %c0_i32 = arith.constant 0 : i32
    %c0_i32_0 = arith.constant 0 : i32
    %c0_i32_1 = arith.constant 0 : i32
    return %c0_i32, %c0_i32_0 : i32, i32
  }
  func.func @transform_4(%arg0: i32, %arg1: i32) -> (i32, i32) {
    %c0_i32 = arith.constant 0 : i32
    %c0_i32_0 = arith.constant 0 : i32
    %c0_i32_1 = arith.constant 0 : i32
    return %c0_i32, %c0_i32_0 : i32, i32
  }
  func.func @transform_5(%arg0: i32, %arg1: i32) -> (i32, i32) {
    %c0_i32 = arith.constant 0 : i32
    %c0_i32_0 = arith.constant 0 : i32
    %c0_i32_1 = arith.constant 0 : i32
    return %c0_i32, %c0_i32_0 : i32, i32
  }
  func.func @transform_6(%arg0: i32, %arg1: i32) -> (i32, i32) {
    %c0_i32 = arith.constant 0 : i32
    %c0_i32_0 = arith.constant 0 : i32
    %c0_i32_1 = arith.constant 0 : i32
    return %c0_i32, %c0_i32_0 : i32, i32
  }
  func.func @transform_7(%arg0: i32, %arg1: i32) -> (i32, i32) {
    %c0_i32 = arith.constant 0 : i32
    %c0_i32_0 = arith.constant 0 : i32
    %c0_i32_1 = arith.constant 0 : i32
    return %c0_i32, %c0_i32_0 : i32, i32
  }
  func.func @transform_8(%arg0: i32, %arg1: i32) -> (i32, i32) {
    %c0_i32 = arith.constant 0 : i32
    %c0_i32_0 = arith.constant 0 : i32
    %c0_i32_1 = arith.constant 0 : i32
    return %c0_i32, %c0_i32_0 : i32, i32
  }
  func.func @transform_9(%arg0: i32, %arg1: i32) -> (i32, i32, i32, i32) {
    %c0_i32 = arith.constant 0 : i32
    %c0_i32_0 = arith.constant 0 : i32
    %c0_i32_1 = arith.constant 0 : i32
    return %arg0, %c0_i32, %arg1, %c0_i32_0 : i32, i32, i32, i32
  }
}

</mosaic_0001>

<llo_original>
// kernel: tpu_custom_call.1
$region0: #{tpu_custom_call.1}
  #allocation0 [shape = 'u32[]', space=smem, size = 0x4, offset = 0x4, fixed_abs, tag = 'smem constant byte address 0x4 - core index']
  #allocation1 [shape = 'u32[144,128]{1,0:T(1,128)}', space=vmem, size = 0x12000, scoped, tag = 'internal scratch']
  %s0 = inlined_call_operand.vmem [shape: f32[2], index: 0, kind: input, shape index: {}]
  %s1 = inlined_call_operand.vmem [shape: f32[2,4,64,16], index: 1, kind: input, shape index: {}]
  %s2 = inlined_call_operand.vmem [shape: f32[4,16,256], index: 2, kind: input, shape index: {}]
  %s3 = inlined_call_operand.vmem [shape: f32[1,256], index: 3, kind: input, shape index: {}]
  %s4 = inlined_call_operand.vmem [shape: f32[128,128], index: 4, kind: input, shape index: {}]
  %s5 = inlined_call_operand.vmem [shape: f32[1,128], index: 5, kind: input, shape index: {}]
  %s6 = inlined_call_operand.vmem [shape: f32[128,256], index: 6, kind: input, shape index: {}]
  %s7 = inlined_call_operand.vmem [shape: f32[1,256], index: 7, kind: input, shape index: {}]
  %s8 = inlined_call_operand.vmem [shape: f32[128,16], index: 8, kind: input, shape index: {}]
  %s9 = inlined_call_operand.vmem [shape: f32[2,2,64,16], index: 9, kind: output, shape index: {}]
  %s10 = sld [smem:[#allocation0]]
  $region73: #{tpu_custom_call.1} parent=0
    _
  %s12 = ssub.s32 1, %s10
  %s13 = scalar_select 0, %s12, %s10
  $region1: #{tpu_custom_call.1} parent=0
    #allocation2 [shape = 'u8[512]{0}', space=smem, size = 0x200, scoped, tag = 'input window, operand 0, single buffered']
    #allocation3 [shape = 's32[2]{0}', space=sflag, size = 0x8, scoped, tag = 'scoped memory for tpu_custom_call.1']
    %14 = vsyncpa [#allocation3], 0
    loop: start=0, step=1, limit=4
    $region2: #{tpu_custom_call.1} parent=1 // loop_pre_header
      _
    $region3: #{tpu_custom_call.1} parent=1 // loop_header
      %s16 = sphi 0, %s20
      %p17 = scmp.ge.s32.totalorder %s16, 4
      %s23 = sphi 0, %s35
      %s24 = sphi 0, %s31
      %s25 = sphi 0, %s23
      %s26 = sphi 0, %s24
      %s27 = sphi 0, %s25
      %s28 = sphi 0, %s26
      %s36 = sphi 0, %s36
      %s38 = sphi 0, %s36
      %s39 = sphi 0, %s38
      %s53 = sphi 0, %s39
      %s61 = sphi 0, %s63
      %s64 = sphi 0, %s61
      %s65 = sphi 0, %s64
      %s81 = sphi 0, %s65
      %s85 = sphi 0, %s85
      %s87 = sphi 0, %s85
      %s88 = sphi 0, %s87
      %s102 = sphi 0, %s88
      %s106 = sphi 0, %s106
      %s108 = sphi 0, %s106
      %s109 = sphi 0, %s108
      %s123 = sphi 0, %s109
      %s127 = sphi 0, %s127
      %s129 = sphi 0, %s127
      %s130 = sphi 0, %s129
      %s144 = sphi 0, %s130
      %s148 = sphi 0, %s148
      %s150 = sphi 0, %s148
      %s151 = sphi 0, %s150
      %s165 = sphi 0, %s151
      %s169 = sphi 0, %s169
      %s171 = sphi 0, %s169
      %s172 = sphi 0, %s171
      %s186 = sphi 0, %s172
      %s190 = sphi 0, %s190
      %s192 = sphi 0, %s190
      %s193 = sphi 0, %s192
      %s207 = sphi 0, %s193
      %s211 = sphi 0, %s211
      %s213 = sphi 0, %s211
      %s214 = sphi 0, %s213
      %s228 = sphi 0, %s214
      %s236 = sphi 0, %s238
      %s239 = sphi 0, %s236
      %s240 = sphi 0, %s239
      %s256 = sphi 0, %s240
    $region4: #{tpu_custom_call.1} parent=1 // loop_header_branch
      %19 = sbr.rel (%p17) target = $region8
    $region5: #{tpu_custom_call.1} parent=1 // loop_body
      %s21 = ssub.s32 %s16, 1
      %s22 = ssub.s32 %s16, 2
      %s29 = sadd.s32 1, %s24
      %p30 = scmp.ge.s32.totalorder %s29, 1
      %s31 = scalar_select %p30, 0, %s29
      %s32 = sadd.s32 1, %s23
      %s33 = scalar_select %p30, %s32, %s23
      %p34 = scmp.ge.s32.totalorder %s33, 2
      %s35 = scalar_select %p34, 0, %s33
      %s37 = sadd.s32 %s36, 1
      %p40 = scmp.eq.s32.totalorder %s16, 1
      %p41 = scmp.ne.s32.totalorder %s36, %s38
      %p42 = scmp.eq.s32.totalorder %s16, 0
      %p43 = por %p41, %p42
      %p44 = scmp.ne.s32.totalorder %s36, %s38
      %p45 = scmp.eq.s32.totalorder %s21, 1
      %p46 = por %p44, %p45
      %p47 = scmp.ne.s32.totalorder %s38, %s39
      %p48 = scmp.eq.s32.totalorder %s21, 0
      %p49 = por %p47, %p48
      %p50 = scmp.ne.s32.totalorder %s38, %s39
      %p51 = scmp.eq.s32.totalorder %s22, 1
      %p52 = por %p50, %p51
      %p54 = scmp.ne.s32.totalorder %s39, %s53
      %p55 = scmp.eq.s32.totalorder %s22, 0
      %p56 = por %p54, %p55
      %s57 = ssub.s32 %s23, %s35
      %s58 = ssub.s32 %s24, %s31
      %s59 = sor.u32 %s57, %s58
      %p60 = scmp.eq.s32.totalorder %s59, 0
      %s62 = sadd.s32 %s61, 1
      %s63 = scalar_select %p60, %s61, %s62
      %p66 = pneg %p60
      %p67 = scmp.eq.s32.totalorder %s16, 1
      %p68 = por %p66, %p67
      %p69 = scmp.ne.s32.totalorder %s61, %s64
      %p70 = scmp.eq.s32.totalorder %s16, 0
      %p71 = por %p69, %p70
      %p72 = scmp.ne.s32.totalorder %s61, %s64
      %p73 = scmp.eq.s32.totalorder %s21, 1
      %p74 = por %p72, %p73
      %p75 = scmp.ne.s32.totalorder %s64, %s65
      %p76 = scmp.eq.s32.totalorder %s21, 0
      %p77 = por %p75, %p76
      %p78 = scmp.ne.s32.totalorder %s64, %s65
      %p79 = scmp.eq.s32.totalorder %s22, 1
      %p80 = por %p78, %p79
      %p82 = scmp.ne.s32.totalorder %s65, %s81
      %p83 = scmp.eq.s32.totalorder %s22, 0
      %p84 = por %p82, %p83
      %s86 = sadd.s32 %s85, 1
      %p89 = scmp.eq.s32.totalorder %s16, 1
      %p90 = scmp.ne.s32.totalorder %s85, %s87
      %p91 = scmp.eq.s32.totalorder %s16, 0
      %p92 = por %p90, %p91
      %p93 = scmp.ne.s32.totalorder %s85, %s87
      %p94 = scmp.eq.s32.totalorder %s21, 1
      %p95 = por %p93, %p94
      %p96 = scmp.ne.s32.totalorder %s87, %s88
      %p97 = scmp.eq.s32.totalorder %s21, 0
      %p98 = por %p96, %p97
      %p99 = scmp.ne.s32.totalorder %s87, %s88
      %p100 = scmp.eq.s32.totalorder %s22, 1
      %p101 = por %p99, %p100
      %p103 = scmp.ne.s32.totalorder %s88, %s102
      %p104 = scmp.eq.s32.totalorder %s22, 0
      %p105 = por %p103, %p104
      %s107 = sadd.s32 %s106, 1
      %p110 = scmp.eq.s32.totalorder %s16, 1
      %p111 = scmp.ne.s32.totalorder %s106, %s108
      %p112 = scmp.eq.s32.totalorder %s16, 0
      %p113 = por %p111, %p112
      %p114 = scmp.ne.s32.totalorder %s106, %s108
      %p115 = scmp.eq.s32.totalorder %s21, 1
      %p116 = por %p114, %p115
      %p117 = scmp.ne.s32.totalorder %s108, %s109
      %p118 = scmp.eq.s32.totalorder %s21, 0
      %p119 = por %p117, %p118
      %p120 = scmp.ne.s32.totalorder %s108, %s109
      %p121 = scmp.eq.s32.totalorder %s22, 1
      %p122 = por %p120, %p121
      %p124 = scmp.ne.s32.totalorder %s109, %s123
      %p125 = scmp.eq.s32.totalorder %s22, 0
      %p126 = por %p124, %p125
      %s128 = sadd.s32 %s127, 1
      %p131 = scmp.eq.s32.totalorder %s16, 1
      %p132 = scmp.ne.s32.totalorder %s127, %s129
      %p133 = scmp.eq.s32.totalorder %s16, 0
      %p134 = por %p132, %p133
      %p135 = scmp.ne.s32.totalorder %s127, %s129
      %p136 = scmp.eq.s32.totalorder %s21, 1
      %p137 = por %p135, %p136
      %p138 = scmp.ne.s32.totalorder %s129, %s130
      %p139 = scmp.eq.s32.totalorder %s21, 0
      %p140 = por %p138, %p139
      %p141 = scmp.ne.s32.totalorder %s129, %s130
      %p142 = scmp.eq.s32.totalorder %s22, 1
      %p143 = por %p141, %p142
      %p145 = scmp.ne.s32.totalorder %s130, %s144
      %p146 = scmp.eq.s32.totalorder %s22, 0
      %p147 = por %p145, %p146
      %s149 = sadd.s32 %s148, 1
      %p152 = scmp.eq.s32.totalorder %s16, 1
      %p153 = scmp.ne.s32.totalorder %s148, %s150
      %p154 = scmp.eq.s32.totalorder %s16, 0
      %p155 = por %p153, %p154
      %p156 = scmp.ne.s32.totalorder %s148, %s150
      %p157 = scmp.eq.s32.totalorder %s21, 1
      %p158 = por %p156, %p157
      %p159 = scmp.ne.s32.totalorder %s150, %s151
      %p160 = scmp.eq.s32.totalorder %s21, 0
      %p161 = por %p159, %p160
      %p162 = scmp.ne.s32.totalorder %s150, %s151
      %p163 = scmp.eq.s32.totalorder %s22, 1
      %p164 = por %p162, %p163
      %p166 = scmp.ne.s32.totalorder %s151, %s165
      %p167 = scmp.eq.s32.totalorder %s22, 0
      %p168 = por %p166, %p167
      %s170 = sadd.s32 %s169, 1
      %p173 = scmp.eq.s32.totalorder %s16, 1
      %p174 = scmp.ne.s32.totalorder %s169, %s171
      %p175 = scmp.eq.s32.totalorder %s16, 0
      %p176 = por %p174, %p175
      %p177 = scmp.ne.s32.totalorder %s169, %s171
      %p178 = scmp.eq.s32.totalorder %s21, 1
      %p179 = por %p177, %p178
      %p180 = scmp.ne.s32.totalorder %s171, %s172
      %p181 = scmp.eq.s32.totalorder %s21, 0
      %p182 = por %p180, %p181
      %p183 = scmp.ne.s32.totalorder %s171, %s172
      %p184 = scmp.eq.s32.totalorder %s22, 1
      %p185 = por %p183, %p184
      %p187 = scmp.ne.s32.totalorder %s172, %s186
      %p188 = scmp.eq.s32.totalorder %s22, 0
      %p189 = por %p187, %p188
      %s191 = sadd.s32 %s190, 1
      %p194 = scmp.eq.s32.totalorder %s16, 1
      %p195 = scmp.ne.s32.totalorder %s190, %s192
      %p196 = scmp.eq.s32.totalorder %s16, 0
      %p197 = por %p195, %p196
      %p198 = scmp.ne.s32.totalorder %s190, %s192
      %p199 = scmp.eq.s32.totalorder %s21, 1
      %p200 = por %p198, %p199
      %p201 = scmp.ne.s32.totalorder %s192, %s193
      %p202 = scmp.eq.s32.totalorder %s21, 0
      %p203 = por %p201, %p202
      %p204 = scmp.ne.s32.totalorder %s192, %s193
      %p205 = scmp.eq.s32.totalorder %s22, 1
      %p206 = por %p204, %p205
      %p208 = scmp.ne.s32.totalorder %s193, %s207
      %p209 = scmp.eq.s32.totalorder %s22, 0
      %p210 = por %p208, %p209
      %s212 = sadd.s32 %s211, 1
      %p215 = scmp.eq.s32.totalorder %s16, 1
      %p216 = scmp.ne.s32.totalorder %s211, %s213
      %p217 = scmp.eq.s32.totalorder %s16, 0
      %p218 = por %p216, %p217
      %p219 = scmp.ne.s32.totalorder %s211, %s213
      %p220 = scmp.eq.s32.totalorder %s21, 1
      %p221 = por %p219, %p220
      %p222 = scmp.ne.s32.totalorder %s213, %s214
      %p223 = scmp.eq.s32.totalorder %s21, 0
      %p224 = por %p222, %p223
      %p225 = scmp.ne.s32.totalorder %s213, %s214
      %p226 = scmp.eq.s32.totalorder %s22, 1
      %p227 = por %p225, %p226
      %p229 = scmp.ne.s32.totalorder %s214, %s228
      %p230 = scmp.eq.s32.totalorder %s22, 0
      %p231 = por %p229, %p230
      %s232 = ssub.s32 %s23, %s35
      %s233 = ssub.s32 %s24, %s31
      %s234 = sor.u32 %s232, %s233
      %p235 = scmp.eq.s32.totalorder %s234, 0
      %s237 = sadd.s32 %s236, 1
      %s238 = scalar_select %p235, %s236, %s237
      %p241 = pneg %p235
      %p242 = scmp.eq.s32.totalorder %s16, 1
      %p243 = por %p241, %p242
      %p244 = scmp.ne.s32.totalorder %s236, %s239
      %p245 = scmp.eq.s32.totalorder %s16, 0
      %p246 = por %p244, %p245
      %p247 = scmp.ne.s32.totalorder %s236, %s239
      %p248 = scmp.eq.s32.totalorder %s21, 1
      %p249 = por %p247, %p248
      %p250 = scmp.ne.s32.totalorder %s239, %s240
      %p251 = scmp.eq.s32.totalorder %s21, 0
      %p252 = por %p250, %p251
      %p253 = scmp.ne.s32.totalorder %s239, %s240
      %p254 = scmp.eq.s32.totalorder %s22, 1
      %p255 = por %p253, %p254
      %p257 = scmp.ne.s32.totalorder %s240, %s256
      %p258 = scmp.eq.s32.totalorder %s22, 0
      %p259 = por %p257, %p258
      %p260 = scmp.le.s32.totalorder 1, %s16
      %p261 = scmp.lt.s32.totalorder %s16, 3
      %p262 = pnand %p260, %p261
      %p263 = pneg %p262
      // Predicated region
      $region9: #{tpu_custom_call.1} parent=5 // pred_check
        _
      $region10: #{tpu_custom_call.1} parent=5 // pred_check_branch
        %265 = sbr.rel (%p262) target = $region12
      $region11: #{tpu_custom_call.1} parent=5 // pred_region
        %s266 = ssub.s32 %s16, 1
        // Predicated region
        $region13: #{tpu_custom_call.1} parent=11 // pred_check
          %p267 = pneg %p49
        $region14: #{tpu_custom_call.1} parent=11 // pred_check_branch
          %269 = sbr.rel (%p267) target = $region16
        $region15: #{tpu_custom_call.1} parent=11 // pred_region
          %s271 = ssub.s32 16, 16
          %272 = vsyncadd [#allocation3], %s271
          %s274 = sshll.u32 %s0, 4
          %s275 = int_to_ptr.vmem [resolvable:$true] %s274
          %277 = dma.vmem_to_smem %s275, 16, [#allocation2], [#allocation3]
        $region16: #{tpu_custom_call.1} parent=11 // pred_fallthru
          _
        // Predicated region
        $region17: #{tpu_custom_call.1} parent=11 // pred_check
          %p278 = pneg %p98
        $region18: #{tpu_custom_call.1} parent=11 // pred_check_branch
          %280 = sbr.rel (%p278) target = $region20
        $region19: #{tpu_custom_call.1} parent=11 // pred_region
          _
        $region20: #{tpu_custom_call.1} parent=11 // pred_fallthru
          _
        // Predicated region
        $region21: #{tpu_custom_call.1} parent=11 // pred_check
          %p281 = pneg %p119
        $region22: #{tpu_custom_call.1} parent=11 // pred_check_branch
          %283 = sbr.rel (%p281) target = $region24
        $region23: #{tpu_custom_call.1} parent=11 // pred_region
          _
        $region24: #{tpu_custom_call.1} parent=11 // pred_fallthru
          _
        // Predicated region
        $region25: #{tpu_custom_call.1} parent=11 // pred_check
          %p284 = pneg %p140
        $region26: #{tpu_custom_call.1} parent=11 // pred_check_branch
          %286 = sbr.rel (%p284) target = $region28
        $region27: #{tpu_custom_call.1} parent=11 // pred_region
          _
        $region28: #{tpu_custom_call.1} parent=11 // pred_fallthru
          _
        // Predicated region
        $region29: #{tpu_custom_call.1} parent=11 // pred_check
          %p287 = pneg %p161
        $region30: #{tpu_custom_call.1} parent=11 // pred_check_branch
          %289 = sbr.rel (%p287) target = $region32
        $region31: #{tpu_custom_call.1} parent=11 // pred_region
          _
        $region32: #{tpu_custom_call.1} parent=11 // pred_fallthru
          _
        // Predicated region
        $region33: #{tpu_custom_call.1} parent=11 // pred_check
          %p290 = pneg %p182
        $region34: #{tpu_custom_call.1} parent=11 // pred_check_branch
          %292 = sbr.rel (%p290) target = $region36
        $region35: #{tpu_custom_call.1} parent=11 // pred_region
          _
        $region36: #{tpu_custom_call.1} parent=11 // pred_fallthru
          _
        // Predicated region
        $region37: #{tpu_custom_call.1} parent=11 // pred_check
          %p293 = pneg %p203
        $region38: #{tpu_custom_call.1} parent=11 // pred_check_branch
          %295 = sbr.rel (%p293) target = $region40
        $region39: #{tpu_custom_call.1} parent=11 // pred_region
          _
        $region40: #{tpu_custom_call.1} parent=11 // pred_fallthru
          _
        // Predicated region
        $region41: #{tpu_custom_call.1} parent=11 // pred_check
          %p296 = pneg %p224
        $region42: #{tpu_custom_call.1} parent=11 // pred_check_branch
          %298 = sbr.rel (%p296) target = $region44
        $region43: #{tpu_custom_call.1} parent=11 // pred_region
          _
        $region44: #{tpu_custom_call.1} parent=11 // pred_fallthru
          _
      $region12: #{tpu_custom_call.1} parent=5 // pred_fallthru
        _
      %p299 = scmp.lt.s32.totalorder %s16, 2
      // Predicated region
      $region45: #{tpu_custom_call.1} parent=5 // pred_check
        %p300 = pneg %p299
      $region46: #{tpu_custom_call.1} parent=5 // pred_check_branch
        %302 = sbr.rel (%p300) target = $region48
      $region47: #{tpu_custom_call.1} parent=5 // pred_region
        // Predicated region
        $region49: #{tpu_custom_call.1} parent=47 // pred_check
          %p303 = pneg %p71
        $region50: #{tpu_custom_call.1} parent=47 // pred_check_branch
          %305 = sbr.rel (%p303) target = $region52
        $region51: #{tpu_custom_call.1} parent=47 // pred_region
          %s306 = smul.u32 8, %s24
          %p307 = scmp.lt.s32.totalorder %s23, 1
          %s308 = scalar_select %p307, %s23, 1
          %p309 = scmp.lt.s32.totalorder %s306, 7
          %s310 = scalar_select %p309, %s306, 7
          %s311 = smul.addr %s308, 32
          %s312 = sadd.s32 %s310, %s311
          %s313 = smul.addr %s312, 8
          %s314 = scalar_lea.vmem %s1, %s313
          %s315 = smul.u32 8, %s24
        $region52: #{tpu_custom_call.1} parent=47 // pred_fallthru
          _
      $region48: #{tpu_custom_call.1} parent=5 // pred_fallthru
        _
      %p316 = scmp.le.s32.totalorder 1, %s16
      %p317 = scmp.lt.s32.totalorder %s16, 3
      %p318 = pnand %p316, %p317
      %p319 = pneg %p318
      // Predicated region
      $region53: #{tpu_custom_call.1} parent=5 // pred_check
        _
      $region54: #{tpu_custom_call.1} parent=5 // pred_check_branch
        %321 = sbr.rel (%p318) target = $region56
      $region55: #{tpu_custom_call.1} parent=5 // pred_region
        %s322 = ssub.s32 %s16, 1
        // Predicated region
        $region57: #{tpu_custom_call.1} parent=55 // pred_check
          %p323 = pneg %p49
        $region58: #{tpu_custom_call.1} parent=55 // pred_check_branch
          %325 = sbr.rel (%p323) target = $region60
        $region59: #{tpu_custom_call.1} parent=55 // pred_region
          %326 = dma.done [#allocation3], 16
        $region60: #{tpu_custom_call.1} parent=55 // pred_fallthru
          _
        %327 = sfence
        %p328 = pneg %p49
        %p329 = pneg %p46
        %s330 = smul.u32 8, %s26
        %p331 = scmp.lt.s32.totalorder %s25, 1
        %s332 = scalar_select %p331, %s25, 1
        %p333 = scmp.lt.s32.totalorder %s330, 7
        %s334 = scalar_select %p333, %s330, 7
        %s335 = smul.addr %s332, 32
        %s336 = sadd.s32 %s334, %s335
        %s337 = smul.addr %s336, 8
        %s338 = scalar_lea.vmem %s1, %s337
        %p339 = pneg %p77
        %p340 = pneg %p74
        %p341 = pneg %p98
        %p342 = pneg %p95
        %p343 = pneg %p119
        %p344 = pneg %p116
        %p345 = pneg %p140
        %p346 = pneg %p137
        %p347 = pneg %p161
        %p348 = pneg %p158
        %p349 = pneg %p182
        %p350 = pneg %p179
        %p351 = pneg %p203
        %p352 = pneg %p200
        %p353 = pneg %p224
        %p354 = pneg %p221
        %p355 = pneg %p252
        %p356 = pneg %p249
        %s357 = smul.u32 8, %s26
        %p358 = scmp.lt.s32.totalorder %s25, 1
        %s359 = scalar_select %p358, %s25, 1
        %p360 = scmp.lt.s32.totalorder %s357, 7
        %s361 = scalar_select %p360, %s357, 7
        %s362 = smul.addr %s359, 16
        %s363 = sadd.s32 %s361, %s362
        %s364 = smul.addr %s363, 8
        %s365 = scalar_lea.vmem %s9, %s364
        %s366 = smul.u32 8, %s26
        %p367 = scmp.lt.s32.totalorder %s25, 1
        %s368 = scalar_select %p367, %s25, 1
        %p369 = scmp.lt.s32.totalorder %s366, 7
        %s370 = scalar_select %p369, %s366, 7
        %s371 = smul.addr %s368, 32
        %s372 = sadd.s32 %s370, %s371
        %s373 = smul.addr %s372, 8
        %s374 = scalar_lea.vmem %s1, %s373
        %s375 = smul.u32 8, %s26
        %s376 = smul.u32 8, %s26
        %p377 = scmp.lt.s32.totalorder %s25, 1
        %s378 = scalar_select %p377, %s25, 1
        %p379 = scmp.lt.s32.totalorder %s376, 7
        %s380 = scalar_select %p379, %s376, 7
        %s381 = smul.addr %s378, 16
        %s382 = sadd.s32 %s380, %s381
        %s383 = smul.addr %s382, 8
        %s384 = scalar_lea.vmem %s9, %s383
        %s385 = smul.u32 8, %s26
        %s386 = sld [smem:[#allocation2 + %s25]]
        %s387 = sadd.f32 %s386, 1e-08
        %v388 = vstv %s387
        %v389 = vrcp.pop %v388
        %s390 = vtos %v389
        %v391 = vld [vmem:[%s374] sm:$0xff]
        %v392 = vld [vmem:[%s374 + $0x8] sm:$0xff]
        %v393 = vld [vmem:[%s374 + $0x10] sm:$0xff]
        %v394 = vld [vmem:[%s374 + $0x18] sm:$0xff]
        %v395 = vld [vmem:[%s374 + $0x20] sm:$0xff]
        %v396 = vld [vmem:[%s374 + $0x28] sm:$0xff]
        %v397 = vld [vmem:[%s374 + $0x30] sm:$0xff]
        %v398 = vld [vmem:[%s374 + $0x38] sm:$0xff]
        %v399 = vstv %s390
        %v400 = vmul.f32 %v391, %v399
        %v401 = vmul.f32 %v392, %v399
        %v402 = vmul.f32 %v393, %v399
        %v403 = vmul.f32 %v394, %v399
        %v404 = vmul.f32 %v395, %v399
        %v405 = vmul.f32 %v396, %v399
        %v406 = vmul.f32 %v397, %v399
        %v407 = vmul.f32 %v398, %v399
        %v408 = vld [vmem:[%s2] sm:$0xff]
        %v409 = vld [vmem:[%s2 + $0x8] sm:$0xff]
        %v410 = vld [vmem:[%s2 + $0x10] sm:$0xff]
        %v411 = vld [vmem:[%s2 + $0x18] sm:$0xff]
        %s412 = scalar_lea.vmem %s374, 64
        %v413 = vld [vmem:[%s412] sm:$0xff]
        %v414 = vld [vmem:[%s412 + $0x8] sm:$0xff]
        %v415 = vld [vmem:[%s412 + $0x10] sm:$0xff]
        %v416 = vld [vmem:[%s412 + $0x18] sm:$0xff]
        %v417 = vld [vmem:[%s412 + $0x20] sm:$0xff]
        %v418 = vld [vmem:[%s412 + $0x28] sm:$0xff]
        %v419 = vld [vmem:[%s412 + $0x30] sm:$0xff]
        %v420 = vld [vmem:[%s412 + $0x38] sm:$0xff]
        %v421 = vmul.f32 %v413, %v399
        %v422 = vmul.f32 %v414, %v399
        %v423 = vmul.f32 %v415, %v399
        %v424 = vmul.f32 %v416, %v399
        %v425 = vmul.f32 %v417, %v399
        %v426 = vmul.f32 %v418, %v399
        %v427 = vmul.f32 %v419, %v399
        %v428 = vmul.f32 %v420, %v399
        %s429 = scalar_lea.vmem %s2, 32
        %v430 = vld [vmem:[%s429] sm:$0xff]
        %v431 = vld [vmem:[%s429 + $0x8] sm:$0xff]
        %v432 = vld [vmem:[%s429 + $0x10] sm:$0xff]
        %v433 = vld [vmem:[%s429 + $0x18] sm:$0xff]
        %vm434 = vcmask 130048
        %v436 = vsel %vm434, %v421, 0
        %v439 = vsel %vm434, %v422, 0
        %v442 = vsel %vm434, %v423, 0
        %v445 = vsel %vm434, %v424, 0
        %v448 = vsel %vm434, %v425, 0
        %v451 = vsel %vm434, %v426, 0
        %v454 = vsel %vm434, %v427, 0
        %v457 = vsel %vm434, %v428, 0
        %459 = vmatprep.subr.mxu0 0.0
        %460 = vmatpush1.msra.mxu0 0.0
        %461 = vmatprep.subr.mxu0 0.0
        %462 = vmatpush1.msra.mxu0 0.0
        %463 = vmatprep.subr.mxu0 0.0
        %464 = vmatpush1.msra.mxu0 0.0
        %465 = vmatprep.subr.mxu0 0.0
        %466 = vmatpush1.msra.mxu0 0.0
        %467 = vmatprep.subr.mxu0 0.0
        %468 = vmatpush1.msra.mxu0 0.0
        %469 = vmatprep.subr.mxu0 0.0
        %470 = vmatpush1.msra.mxu0 0.0
        %471 = vmatprep.subr.mxu0 0.0
        %472 = vmatpush1.msra.mxu0 0.0
        %473 = vmatprep.subr.mxu0 0.0
        %474 = vmatpush1.msra.mxu0 0.0
        %475 = vmatprep.subr.mxu0 0.0
        %476 = vmatpush1.msra.mxu0 0.0
        %477 = vmatprep.subr.mxu0 0.0
        %478 = vmatpush1.msra.mxu0 0.0
        %479 = vmatprep.subr.mxu0 0.0
        %480 = vmatpush1.msra.mxu0 0.0
        %481 = vmatprep.subr.mxu0 0.0
        %482 = vmatpush1.msra.mxu0 0.0
        %483 = vmatprep.subr.mxu0 0.0
        %484 = vmatpush1.msra.mxu0 0.0
        %485 = vmatprep.subr.mxu0 0.0
        %486 = vmatpush1.msra.mxu0 0.0
        %487 = vmatprep.subr.mxu0 %v433
        %488 = vmatpush1.msra.mxu0 %v432
        %489 = vmatprep.subr.mxu0 %v431
        %490 = vmatpush1.msra.mxu0 %v430
        %491 = vmatprep.subr.mxu0 0.0
        %492 = vmatpush2.msra.mxu0 0.0
        %493 = vmatprep.subr.mxu0 0.0
        %494 = vmatpush2.msra.mxu0 0.0
        %495 = vmatprep.subr.mxu0 0.0
        %496 = vmatpush2.msra.mxu0 0.0
        %497 = vmatprep.subr.mxu0 0.0
        %498 = vmatpush2.msra.mxu0 0.0
        %499 = vmatprep.subr.mxu0 0.0
        %500 = vmatpush2.msra.mxu0 0.0
        %501 = vmatprep.subr.mxu0 0.0
        %502 = vmatpush2.msra.mxu0 0.0
        %503 = vmatprep.subr.mxu0 0.0
        %504 = vmatpush2.msra.mxu0 0.0
        %505 = vmatprep.subr.mxu0 0.0
        %506 = vmatpush2.msra.mxu0 0.0
        %507 = vmatprep.subr.mxu0 0.0
        %508 = vmatpush2.msra.mxu0 0.0
        %509 = vmatprep.subr.mxu0 0.0
        %510 = vmatpush2.msra.mxu0 0.0
        %511 = vmatprep.subr.mxu0 0.0
        %512 = vmatpush2.msra.mxu0 0.0
        %513 = vmatprep.subr.mxu0 0.0
        %514 = vmatpush2.msra.mxu0 0.0
        %515 = vmatprep.subr.mxu0 0.0
        %516 = vmatpush2.msra.mxu0 0.0
        %517 = vmatprep.subr.mxu0 0.0
        %518 = vmatpush2.msra.mxu0 0.0
        %519 = vmatprep.subr.mxu0 0.0
        %520 = vmatpush2.msra.mxu0 0.0
        %521 = vmatprep.subr.mxu0 0.0
        %522 = vmatpush2.msra.mxu0 0.0
        %523 = vmatprep.mubr.f32.mxu0 0.0
        %524 = vmatmul.mubr.f32.gmra.mxu0 %v436
        %v525 = vpop.f32.mrf.mxu0
        %v526 = vadd.f32 0.0, %v525
        %v527 = vpop.f32.mrf.mxu0
        %v528 = vadd.f32 0.0, %v527
        %529 = vmatprep.mubr.f32.mxu0 0.0
        %530 = vmatmul.mubr.f32.gmra.mxu0 %v439
        %v531 = vpop.f32.mrf.mxu0
        %v532 = vadd.f32 0.0, %v531
        %v533 = vpop.f32.mrf.mxu0
        %v534 = vadd.f32 0.0, %v533
        %535 = vmatprep.mubr.f32.mxu0 0.0
        %536 = vmatmul.mubr.f32.gmra.mxu0 %v442
        %v537 = vpop.f32.mrf.mxu0
        %v538 = vadd.f32 0.0, %v537
        %v539 = vpop.f32.mrf.mxu0
        %v540 = vadd.f32 0.0, %v539
        %541 = vmatprep.mubr.f32.mxu0 0.0
        %542 = vmatmul.mubr.f32.gmra.mxu0 %v445
        %v543 = vpop.f32.mrf.mxu0
        %v544 = vadd.f32 0.0, %v543
        %v545 = vpop.f32.mrf.mxu0
        %v546 = vadd.f32 0.0, %v545
        %547 = vmatprep.mubr.f32.mxu0 0.0
        %548 = vmatmul.mubr.f32.gmra.mxu0 %v448
        %v549 = vpop.f32.mrf.mxu0
        %v550 = vadd.f32 0.0, %v549
        %v551 = vpop.f32.mrf.mxu0
        %v552 = vadd.f32 0.0, %v551
        %553 = vmatprep.mubr.f32.mxu0 0.0
        %554 = vmatmul.mubr.f32.gmra.mxu0 %v451
        %v555 = vpop.f32.mrf.mxu0
        %v556 = vadd.f32 0.0, %v555
        %v557 = vpop.f32.mrf.mxu0
        %v558 = vadd.f32 0.0, %v557
        %559 = vmatprep.mubr.f32.mxu0 0.0
        %560 = vmatmul.mubr.f32.gmra.mxu0 %v454
        %v561 = vpop.f32.mrf.mxu0
        %v562 = vadd.f32 0.0, %v561
        %v563 = vpop.f32.mrf.mxu0
        %v564 = vadd.f32 0.0, %v563
        %565 = vmatprep.mubr.f32.mxu0 0.0
        %566 = vmatmul.mubr.f32.gmra.mxu0 %v457
        %v567 = vpop.f32.mrf.mxu0
        %v568 = vadd.f32 0.0, %v567
        %v569 = vpop.f32.mrf.mxu0
        %v570 = vadd.f32 0.0, %v569
        %571 = vdwg.mxu0
        %v573 = vsel %vm434, %v400, 0
        %v576 = vsel %vm434, %v401, 0
        %v579 = vsel %vm434, %v402, 0
        %v582 = vsel %vm434, %v403, 0
        %v585 = vsel %vm434, %v404, 0
        %v588 = vsel %vm434, %v405, 0
        %v591 = vsel %vm434, %v406, 0
        %v594 = vsel %vm434, %v407, 0
        %596 = vmatprep.subr.mxu0 0.0
        %597 = vmatpush1.msra.mxu0 0.0
        %598 = vmatprep.subr.mxu0 0.0
        %599 = vmatpush1.msra.mxu0 0.0
        %600 = vmatprep.subr.mxu0 0.0
        %601 = vmatpush1.msra.mxu0 0.0
        %602 = vmatprep.subr.mxu0 0.0
        %603 = vmatpush1.msra.mxu0 0.0
        %604 = vmatprep.subr.mxu0 0.0
        %605 = vmatpush1.msra.mxu0 0.0
        %606 = vmatprep.subr.mxu0 0.0
        %607 = vmatpush1.msra.mxu0 0.0
        %608 = vmatprep.subr.mxu0 0.0
        %609 = vmatpush1.msra.mxu0 0.0
        %610 = vmatprep.subr.mxu0 0.0
        %611 = vmatpush1.msra.mxu0 0.0
        %612 = vmatprep.subr.mxu0 0.0
        %613 = vmatpush1.msra.mxu0 0.0
        %614 = vmatprep.subr.mxu0 0.0
        %615 = vmatpush1.msra.mxu0 0.0
        %616 = vmatprep.subr.mxu0 0.0
        %617 = vmatpush1.msra.mxu0 0.0
        %618 = vmatprep.subr.mxu0 0.0
        %619 = vmatpush1.msra.mxu0 0.0
        %620 = vmatprep.subr.mxu0 0.0
        %621 = vmatpush1.msra.mxu0 0.0
        %622 = vmatprep.subr.mxu0 0.0
        %623 = vmatpush1.msra.mxu0 0.0
        %624 = vmatprep.subr.mxu0 %v411
        %625 = vmatpush1.msra.mxu0 %v410
        %626 = vmatprep.subr.mxu0 %v409
        %627 = vmatpush1.msra.mxu0 %v408
        %628 = vmatprep.subr.mxu0 0.0
        %629 = vmatpush2.msra.mxu0 0.0
        %630 = vmatprep.subr.mxu0 0.0
        %631 = vmatpush2.msra.mxu0 0.0
        %632 = vmatprep.subr.mxu0 0.0
        %633 = vmatpush2.msra.mxu0 0.0
        %634 = vmatprep.subr.mxu0 0.0
        %635 = vmatpush2.msra.mxu0 0.0
        %636 = vmatprep.subr.mxu0 0.0
        %637 = vmatpush2.msra.mxu0 0.0
        %638 = vmatprep.subr.mxu0 0.0
        %639 = vmatpush2.msra.mxu0 0.0
        %640 = vmatprep.subr.mxu0 0.0
        %641 = vmatpush2.msra.mxu0 0.0
        %642 = vmatprep.subr.mxu0 0.0
        %643 = vmatpush2.msra.mxu0 0.0
        %644 = vmatprep.subr.mxu0 0.0
        %645 = vmatpush2.msra.mxu0 0.0
        %646 = vmatprep.subr.mxu0 0.0
        %647 = vmatpush2.msra.mxu0 0.0
        %648 = vmatprep.subr.mxu0 0.0
        %649 = vmatpush2.msra.mxu0 0.0
        %650 = vmatprep.subr.mxu0 0.0
        %651 = vmatpush2.msra.mxu0 0.0
        %652 = vmatprep.subr.mxu0 0.0
        %653 = vmatpush2.msra.mxu0 0.0
        %654 = vmatprep.subr.mxu0 0.0
        %655 = vmatpush2.msra.mxu0 0.0
        %656 = vmatprep.subr.mxu0 0.0
        %657 = vmatpush2.msra.mxu0 0.0
        %658 = vmatprep.subr.mxu0 0.0
        %659 = vmatpush2.msra.mxu0 0.0
        %660 = vmatprep.mubr.f32.mxu0 0.0
        %661 = vmatmul.mubr.f32.gmra.mxu0 %v573
        %v662 = vpop.f32.mrf.mxu0
        %v663 = vadd.f32 %v526, %v662
        %v664 = vpop.f32.mrf.mxu0
        %v665 = vadd.f32 %v528, %v664
        %666 = vmatprep.mubr.f32.mxu0 0.0
        %667 = vmatmul.mubr.f32.gmra.mxu0 %v576
        %v668 = vpop.f32.mrf.mxu0
        %v669 = vadd.f32 %v532, %v668
        %v670 = vpop.f32.mrf.mxu0
        %v671 = vadd.f32 %v534, %v670
        %672 = vmatprep.mubr.f32.mxu0 0.0
        %673 = vmatmul.mubr.f32.gmra.mxu0 %v579
        %v674 = vpop.f32.mrf.mxu0
        %v675 = vadd.f32 %v538, %v674
        %v676 = vpop.f32.mrf.mxu0
        %v677 = vadd.f32 %v540, %v676
        %678 = vmatprep.mubr.f32.mxu0 0.0
        %679 = vmatmul.mubr.f32.gmra.mxu0 %v582
        %v680 = vpop.f32.mrf.mxu0
        %v681 = vadd.f32 %v544, %v680
        %v682 = vpop.f32.mrf.mxu0
        %v683 = vadd.f32 %v546, %v682
        %684 = vmatprep.mubr.f32.mxu0 0.0
        %685 = vmatmul.mubr.f32.gmra.mxu0 %v585
        %v686 = vpop.f32.mrf.mxu0
        %v687 = vadd.f32 %v550, %v686
        %v688 = vpop.f32.mrf.mxu0
        %v689 = vadd.f32 %v552, %v688
        %690 = vmatprep.mubr.f32.mxu0 0.0
        %691 = vmatmul.mubr.f32.gmra.mxu0 %v588
        %v692 = vpop.f32.mrf.mxu0
        %v693 = vadd.f32 %v556, %v692
        %v694 = vpop.f32.mrf.mxu0
        %v695 = vadd.f32 %v558, %v694
        %696 = vmatprep.mubr.f32.mxu0 0.0
        %697 = vmatmul.mubr.f32.gmra.mxu0 %v591
        %v698 = vpop.f32.mrf.mxu0
        %v699 = vadd.f32 %v562, %v698
        %v700 = vpop.f32.mrf.mxu0
        %v701 = vadd.f32 %v564, %v700
        %702 = vmatprep.mubr.f32.mxu0 0.0
        %703 = vmatmul.mubr.f32.gmra.mxu0 %v594
        %v704 = vpop.f32.mrf.mxu0
        %v705 = vadd.f32 %v568, %v704
        %v706 = vpop.f32.mrf.mxu0
        %v707 = vadd.f32 %v570, %v706
        %708 = vdwg.mxu0
        %s709 = scalar_lea.vmem %s374, 128
        %v710 = vld [vmem:[%s709] sm:$0xff]
        %v711 = vld [vmem:[%s709 + $0x8] sm:$0xff]
        %v712 = vld [vmem:[%s709 + $0x10] sm:$0xff]
        %v713 = vld [vmem:[%s709 + $0x18] sm:$0xff]
        %v714 = vld [vmem:[%s709 + $0x20] sm:$0xff]
        %v715 = vld [vmem:[%s709 + $0x28] sm:$0xff]
        %v716 = vld [vmem:[%s709 + $0x30] sm:$0xff]
        %v717 = vld [vmem:[%s709 + $0x38] sm:$0xff]
        %v718 = vmul.f32 %v710, %v399
        %v719 = vmul.f32 %v711, %v399
        %v720 = vmul.f32 %v712, %v399
        %v721 = vmul.f32 %v713, %v399
        %v722 = vmul.f32 %v714, %v399
        %v723 = vmul.f32 %v715, %v399
        %v724 = vmul.f32 %v716, %v399
        %v725 = vmul.f32 %v717, %v399
        %s726 = scalar_lea.vmem %s2, 64
        %v727 = vld [vmem:[%s726] sm:$0xff]
        %v728 = vld [vmem:[%s726 + $0x8] sm:$0xff]
        %v729 = vld [vmem:[%s726 + $0x10] sm:$0xff]
        %v730 = vld [vmem:[%s726 + $0x18] sm:$0xff]
        %v732 = vsel %vm434, %v718, 0
        %v735 = vsel %vm434, %v719, 0
        %v738 = vsel %vm434, %v720, 0
        %v741 = vsel %vm434, %v721, 0
        %v744 = vsel %vm434, %v722, 0
        %v747 = vsel %vm434, %v723, 0
        %v750 = vsel %vm434, %v724, 0
        %v753 = vsel %vm434, %v725, 0
        %755 = vmatprep.subr.mxu0 0.0
        %756 = vmatpush1.msra.mxu0 0.0
        %757 = vmatprep.subr.mxu0 0.0
        %758 = vmatpush1.msra.mxu0 0.0
        %759 = vmatprep.subr.mxu0 0.0
        %760 = vmatpush1.msra.mxu0 0.0
        %761 = vmatprep.subr.mxu0 0.0
        %762 = vmatpush1.msra.mxu0 0.0
        %763 = vmatprep.subr.mxu0 0.0
        %764 = vmatpush1.msra.mxu0 0.0
        %765 = vmatprep.subr.mxu0 0.0
        %766 = vmatpush1.msra.mxu0 0.0
        %767 = vmatprep.subr.mxu0 0.0
        %768 = vmatpush1.msra.mxu0 0.0
        %769 = vmatprep.subr.mxu0 0.0
        %770 = vmatpush1.msra.mxu0 0.0
        %771 = vmatprep.subr.mxu0 0.0
        %772 = vmatpush1.msra.mxu0 0.0
        %773 = vmatprep.subr.mxu0 0.0
        %774 = vmatpush1.msra.mxu0 0.0
        %775 = vmatprep.subr.mxu0 0.0
        %776 = vmatpush1.msra.mxu0 0.0
        %777 = vmatprep.subr.mxu0 0.0
        %778 = vmatpush1.msra.mxu0 0.0
        %779 = vmatprep.subr.mxu0 0.0
        %780 = vmatpush1.msra.mxu0 0.0
        %781 = vmatprep.subr.mxu0 0.0
        %782 = vmatpush1.msra.mxu0 0.0
        %783 = vmatprep.subr.mxu0 %v730
        %784 = vmatpush1.msra.mxu0 %v729
        %785 = vmatprep.subr.mxu0 %v728
        %786 = vmatpush1.msra.mxu0 %v727
        %787 = vmatprep.subr.mxu0 0.0
        %788 = vmatpush2.msra.mxu0 0.0
        %789 = vmatprep.subr.mxu0 0.0
        %790 = vmatpush2.msra.mxu0 0.0
        %791 = vmatprep.subr.mxu0 0.0
        %792 = vmatpush2.msra.mxu0 0.0
        %793 = vmatprep.subr.mxu0 0.0
        %794 = vmatpush2.msra.mxu0 0.0
        %795 = vmatprep.subr.mxu0 0.0
        %796 = vmatpush2.msra.mxu0 0.0
        %797 = vmatprep.subr.mxu0 0.0
        %798 = vmatpush2.msra.mxu0 0.0
        %799 = vmatprep.subr.mxu0 0.0
        %800 = vmatpush2.msra.mxu0 0.0
        %801 = vmatprep.subr.mxu0 0.0
        %802 = vmatpush2.msra.mxu0 0.0
        %803 = vmatprep.subr.mxu0 0.0
        %804 = vmatpush2.msra.mxu0 0.0
        %805 = vmatprep.subr.mxu0 0.0
        %806 = vmatpush2.msra.mxu0 0.0
        %807 = vmatprep.subr.mxu0 0.0
        %808 = vmatpush2.msra.mxu0 0.0
        %809 = vmatprep.subr.mxu0 0.0
        %810 = vmatpush2.msra.mxu0 0.0
        %811 = vmatprep.subr.mxu0 0.0
        %812 = vmatpush2.msra.mxu0 0.0
        %813 = vmatprep.subr.mxu0 0.0
        %814 = vmatpush2.msra.mxu0 0.0
        %815 = vmatprep.subr.mxu0 0.0
        %816 = vmatpush2.msra.mxu0 0.0
        %817 = vmatprep.subr.mxu0 0.0
        %818 = vmatpush2.msra.mxu0 0.0
        %819 = vmatprep.mubr.f32.mxu0 0.0
        %820 = vmatmul.mubr.f32.gmra.mxu0 %v732
        %v821 = vpop.f32.mrf.mxu0
        %v822 = vadd.f32 0.0, %v821
        %v823 = vpop.f32.mrf.mxu0
        %v824 = vadd.f32 0.0, %v823
        %825 = vmatprep.mubr.f32.mxu0 0.0
        %826 = vmatmul.mubr.f32.gmra.mxu0 %v735
        %v827 = vpop.f32.mrf.mxu0
        %v828 = vadd.f32 0.0, %v827
        %v829 = vpop.f32.mrf.mxu0
        %v830 = vadd.f32 0.0, %v829
        %831 = vmatprep.mubr.f32.mxu0 0.0
        %832 = vmatmul.mubr.f32.gmra.mxu0 %v738
        %v833 = vpop.f32.mrf.mxu0
        %v834 = vadd.f32 0.0, %v833
        %v835 = vpop.f32.mrf.mxu0
        %v836 = vadd.f32 0.0, %v835
        %837 = vmatprep.mubr.f32.mxu0 0.0
        %838 = vmatmul.mubr.f32.gmra.mxu0 %v741
        %v839 = vpop.f32.mrf.mxu0
        %v840 = vadd.f32 0.0, %v839
        %v841 = vpop.f32.mrf.mxu0
        %v842 = vadd.f32 0.0, %v841
        %843 = vmatprep.mubr.f32.mxu0 0.0
        %844 = vmatmul.mubr.f32.gmra.mxu0 %v744
        %v845 = vpop.f32.mrf.mxu0
        %v846 = vadd.f32 0.0, %v845
        %v847 = vpop.f32.mrf.mxu0
        %v848 = vadd.f32 0.0, %v847
        %849 = vmatprep.mubr.f32.mxu0 0.0
        %850 = vmatmul.mubr.f32.gmra.mxu0 %v747
        %v851 = vpop.f32.mrf.mxu0
        %v852 = vadd.f32 0.0, %v851
        %v853 = vpop.f32.mrf.mxu0
        %v854 = vadd.f32 0.0, %v853
        %855 = vmatprep.mubr.f32.mxu0 0.0
        %856 = vmatmul.mubr.f32.gmra.mxu0 %v750
        %v857 = vpop.f32.mrf.mxu0
        %v858 = vadd.f32 0.0, %v857
        %v859 = vpop.f32.mrf.mxu0
        %v860 = vadd.f32 0.0, %v859
        %861 = vmatprep.mubr.f32.mxu0 0.0
        %862 = vmatmul.mubr.f32.gmra.mxu0 %v753
        %v863 = vpop.f32.mrf.mxu0
        %v864 = vadd.f32 0.0, %v863
        %v865 = vpop.f32.mrf.mxu0
        %v866 = vadd.f32 0.0, %v865
        %867 = vdwg.mxu0
        %v868 = vadd.f32 %v663, %v822
        %v869 = vadd.f32 %v665, %v824
        %v870 = vadd.f32 %v669, %v828
        %v871 = vadd.f32 %v671, %v830
        %v872 = vadd.f32 %v675, %v834
        %v873 = vadd.f32 %v677, %v836
        %v874 = vadd.f32 %v681, %v840
        %v875 = vadd.f32 %v683, %v842
        %v876 = vadd.f32 %v687, %v846
        %v877 = vadd.f32 %v689, %v848
        %v878 = vadd.f32 %v693, %v852
        %v879 = vadd.f32 %v695, %v854
        %v880 = vadd.f32 %v699, %v858
        %v881 = vadd.f32 %v701, %v860
        %v882 = vadd.f32 %v705, %v864
        %v883 = vadd.f32 %v707, %v866
        %s884 = scalar_lea.vmem %s374, 192
        %v885 = vld [vmem:[%s884] sm:$0xff]
        %v886 = vld [vmem:[%s884 + $0x8] sm:$0xff]
        %v887 = vld [vmem:[%s884 + $0x10] sm:$0xff]
        %v888 = vld [vmem:[%s884 + $0x18] sm:$0xff]
        %v889 = vld [vmem:[%s884 + $0x20] sm:$0xff]
        %v890 = vld [vmem:[%s884 + $0x28] sm:$0xff]
        %v891 = vld [vmem:[%s884 + $0x30] sm:$0xff]
        %v892 = vld [vmem:[%s884 + $0x38] sm:$0xff]
        %v893 = vmul.f32 %v885, %v399
        %v894 = vmul.f32 %v886, %v399
        %v895 = vmul.f32 %v887, %v399
        %v896 = vmul.f32 %v888, %v399
        %v897 = vmul.f32 %v889, %v399
        %v898 = vmul.f32 %v890, %v399
        %v899 = vmul.f32 %v891, %v399
        %v900 = vmul.f32 %v892, %v399
        %s901 = scalar_lea.vmem %s2, 96
        %v902 = vld [vmem:[%s901] sm:$0xff]
        %v903 = vld [vmem:[%s901 + $0x8] sm:$0xff]
        %v904 = vld [vmem:[%s901 + $0x10] sm:$0xff]
        %v905 = vld [vmem:[%s901 + $0x18] sm:$0xff]
        %v907 = vsel %vm434, %v893, 0
        %v910 = vsel %vm434, %v894, 0
        %v913 = vsel %vm434, %v895, 0
        %v916 = vsel %vm434, %v896, 0
        %v919 = vsel %vm434, %v897, 0
        %v922 = vsel %vm434, %v898, 0
        %v925 = vsel %vm434, %v899, 0
        %v928 = vsel %vm434, %v900, 0
        %930 = vmatprep.subr.mxu0 0.0
        %931 = vmatpush1.msra.mxu0 0.0
        %932 = vmatprep.subr.mxu0 0.0
        %933 = vmatpush1.msra.mxu0 0.0
        %934 = vmatprep.subr.mxu0 0.0
        %935 = vmatpush1.msra.mxu0 0.0
        %936 = vmatprep.subr.mxu0 0.0
        %937 = vmatpush1.msra.mxu0 0.0
        %938 = vmatprep.subr.mxu0 0.0
        %939 = vmatpush1.msra.mxu0 0.0
        %940 = vmatprep.subr.mxu0 0.0
        %941 = vmatpush1.msra.mxu0 0.0
        %942 = vmatprep.subr.mxu0 0.0
        %943 = vmatpush1.msra.mxu0 0.0
        %944 = vmatprep.subr.mxu0 0.0
        %945 = vmatpush1.msra.mxu0 0.0
        %946 = vmatprep.subr.mxu0 0.0
        %947 = vmatpush1.msra.mxu0 0.0
        %948 = vmatprep.subr.mxu0 0.0
        %949 = vmatpush1.msra.mxu0 0.0
        %950 = vmatprep.subr.mxu0 0.0
        %951 = vmatpush1.msra.mxu0 0.0
        %952 = vmatprep.subr.mxu0 0.0
        %953 = vmatpush1.msra.mxu0 0.0
        %954 = vmatprep.subr.mxu0 0.0
        %955 = vmatpush1.msra.mxu0 0.0
        %956 = vmatprep.subr.mxu0 0.0
        %957 = vmatpush1.msra.mxu0 0.0
        %958 = vmatprep.subr.mxu0 %v905
        %959 = vmatpush1.msra.mxu0 %v904
        %960 = vmatprep.subr.mxu0 %v903
        %961 = vmatpush1.msra.mxu0 %v902
        %962 = vmatprep.subr.mxu0 0.0
        %963 = vmatpush2.msra.mxu0 0.0
        %964 = vmatprep.subr.mxu0 0.0
        %965 = vmatpush2.msra.mxu0 0.0
        %966 = vmatprep.subr.mxu0 0.0
        %967 = vmatpush2.msra.mxu0 0.0
        %968 = vmatprep.subr.mxu0 0.0
        %969 = vmatpush2.msra.mxu0 0.0
        %970 = vmatprep.subr.mxu0 0.0
        %971 = vmatpush2.msra.mxu0 0.0
        %972 = vmatprep.subr.mxu0 0.0
        %973 = vmatpush2.msra.mxu0 0.0
        %974 = vmatprep.subr.mxu0 0.0
        %975 = vmatpush2.msra.mxu0 0.0
        %976 = vmatprep.subr.mxu0 0.0
        %977 = vmatpush2.msra.mxu0 0.0
        %978 = vmatprep.subr.mxu0 0.0
        %979 = vmatpush2.msra.mxu0 0.0
        %980 = vmatprep.subr.mxu0 0.0
        %981 = vmatpush2.msra.mxu0 0.0
        %982 = vmatprep.subr.mxu0 0.0
        %983 = vmatpush2.msra.mxu0 0.0
        %984 = vmatprep.subr.mxu0 0.0
        %985 = vmatpush2.msra.mxu0 0.0
        %986 = vmatprep.subr.mxu0 0.0
        %987 = vmatpush2.msra.mxu0 0.0
        %988 = vmatprep.subr.mxu0 0.0
        %989 = vmatpush2.msra.mxu0 0.0
        %990 = vmatprep.subr.mxu0 0.0
        %991 = vmatpush2.msra.mxu0 0.0
        %992 = vmatprep.subr.mxu0 0.0
        %993 = vmatpush2.msra.mxu0 0.0
        %994 = vmatprep.mubr.f32.mxu0 0.0
        %995 = vmatmul.mubr.f32.gmra.mxu0 %v907
        %v996 = vpop.f32.mrf.mxu0
        %v997 = vadd.f32 0.0, %v996
        %v998 = vpop.f32.mrf.mxu0
        %v999 = vadd.f32 0.0, %v998
        %1000 = vmatprep.mubr.f32.mxu0 0.0
        %1001 = vmatmul.mubr.f32.gmra.mxu0 %v910
        %v1002 = vpop.f32.mrf.mxu0
        %v1003 = vadd.f32 0.0, %v1002
        %v1004 = vpop.f32.mrf.mxu0
        %v1005 = vadd.f32 0.0, %v1004
        %1006 = vmatprep.mubr.f32.mxu0 0.0
        %1007 = vmatmul.mubr.f32.gmra.mxu0 %v913
        %v1008 = vpop.f32.mrf.mxu0
        %v1009 = vadd.f32 0.0, %v1008
        %v1010 = vpop.f32.mrf.mxu0
        %v1011 = vadd.f32 0.0, %v1010
        %1012 = vmatprep.mubr.f32.mxu0 0.0
        %1013 = vmatmul.mubr.f32.gmra.mxu0 %v916
        %v1014 = vpop.f32.mrf.mxu0
        %v1015 = vadd.f32 0.0, %v1014
        %v1016 = vpop.f32.mrf.mxu0
        %v1017 = vadd.f32 0.0, %v1016
        %1018 = vmatprep.mubr.f32.mxu0 0.0
        %1019 = vmatmul.mubr.f32.gmra.mxu0 %v919
        %v1020 = vpop.f32.mrf.mxu0
        %v1021 = vadd.f32 0.0, %v1020
        %v1022 = vpop.f32.mrf.mxu0
        %v1023 = vadd.f32 0.0, %v1022
        %1024 = vmatprep.mubr.f32.mxu0 0.0
        %1025 = vmatmul.mubr.f32.gmra.mxu0 %v922
        %v1026 = vpop.f32.mrf.mxu0
        %v1027 = vadd.f32 0.0, %v1026
        %v1028 = vpop.f32.mrf.mxu0
        %v1029 = vadd.f32 0.0, %v1028
        %1030 = vmatprep.mubr.f32.mxu0 0.0
        %1031 = vmatmul.mubr.f32.gmra.mxu0 %v925
        %v1032 = vpop.f32.mrf.mxu0
        %v1033 = vadd.f32 0.0, %v1032
        %v1034 = vpop.f32.mrf.mxu0
        %v1035 = vadd.f32 0.0, %v1034
        %1036 = vmatprep.mubr.f32.mxu0 0.0
        %1037 = vmatmul.mubr.f32.gmra.mxu0 %v928
        %v1038 = vpop.f32.mrf.mxu0
        %v1039 = vadd.f32 0.0, %v1038
        %v1040 = vpop.f32.mrf.mxu0
        %v1041 = vadd.f32 0.0, %v1040
        %1042 = vdwg.mxu0
        %v1043 = vadd.f32 %v868, %v997
        %v1044 = vadd.f32 %v869, %v999
        %v1045 = vadd.f32 %v870, %v1003
        %v1046 = vadd.f32 %v871, %v1005
        %v1047 = vadd.f32 %v872, %v1009
        %v1048 = vadd.f32 %v873, %v1011
        %v1049 = vadd.f32 %v874, %v1015
        %v1050 = vadd.f32 %v875, %v1017
        %v1051 = vadd.f32 %v876, %v1021
        %v1052 = vadd.f32 %v877, %v1023
        %v1053 = vadd.f32 %v878, %v1027
        %v1054 = vadd.f32 %v879, %v1029
        %v1055 = vadd.f32 %v880, %v1033
        %v1056 = vadd.f32 %v881, %v1035
        %v1057 = vadd.f32 %v882, %v1039
        %v1058 = vadd.f32 %v883, %v1041
        %v1059 = vld [vmem:[%s3] sm:$0x3]
        %v1061 = vlaneseq
        %v1062 = vshrl.u32 %v1061, 7
        %v1063 = vsub.s32 0, %v1062
        %v1064 = vrot.slane %v1059, %v1063
        %v1065 = vlaneseq
        %v1066 = vshrl.u32 %v1065, 7
        %v1067 = vsub.s32 1, %v1066
        %v1068 = vrot.slane %v1059, %v1067
        %v1071 = vadd.f32 %v1043, %v1064
        %v1072 = vadd.f32 %v1044, %v1068
        %v1073 = vadd.f32 %v1045, %v1064
        %v1074 = vadd.f32 %v1046, %v1068
        %v1075 = vadd.f32 %v1047, %v1064
        %v1076 = vadd.f32 %v1048, %v1068
        %v1077 = vadd.f32 %v1049, %v1064
        %v1078 = vadd.f32 %v1050, %v1068
        %v1079 = vadd.f32 %v1051, %v1064
        %v1080 = vadd.f32 %v1052, %v1068
        %v1081 = vadd.f32 %v1053, %v1064
        %v1082 = vadd.f32 %v1054, %v1068
        %v1083 = vadd.f32 %v1055, %v1064
        %v1084 = vadd.f32 %v1056, %v1068
        %v1085 = vadd.f32 %v1057, %v1064
        %v1086 = vadd.f32 %v1058, %v1068
        %v1087 = vmax.f32 %v1071, 0.0
        %v1088 = vmax.f32 %v1072, 0.0
        %v1089 = vmax.f32 %v1073, 0.0
        %v1090 = vmax.f32 %v1074, 0.0
        %v1091 = vmax.f32 %v1075, 0.0
        %v1092 = vmax.f32 %v1076, 0.0
        %v1093 = vmax.f32 %v1077, 0.0
        %v1094 = vmax.f32 %v1078, 0.0
        %v1095 = vmax.f32 %v1079, 0.0
        %v1096 = vmax.f32 %v1080, 0.0
        %v1097 = vmax.f32 %v1081, 0.0
        %v1098 = vmax.f32 %v1082, 0.0
        %v1099 = vmax.f32 %v1083, 0.0
        %v1100 = vmax.f32 %v1084, 0.0
        %v1101 = vmax.f32 %v1085, 0.0
        %v1102 = vmax.f32 %v1086, 0.0
        %v1103 = vld [vmem:[%s4] sm:$0xff]
        %v1104 = vld [vmem:[%s4 + $0x8] sm:$0xff]
        %v1105 = vld [vmem:[%s4 + $0x10] sm:$0xff]
        %v1106 = vld [vmem:[%s4 + $0x18] sm:$0xff]
        %v1107 = vld [vmem:[%s4 + $0x20] sm:$0xff]
        %v1108 = vld [vmem:[%s4 + $0x28] sm:$0xff]
        %v1109 = vld [vmem:[%s4 + $0x30] sm:$0xff]
        %v1110 = vld [vmem:[%s4 + $0x38] sm:$0xff]
        %v1111 = vld [vmem:[%s4 + $0x40] sm:$0xff]
        %v1112 = vld [vmem:[%s4 + $0x48] sm:$0xff]
        %v1113 = vld [vmem:[%s4 + $0x50] sm:$0xff]
        %v1114 = vld [vmem:[%s4 + $0x58] sm:$0xff]
        %v1115 = vld [vmem:[%s4 + $0x60] sm:$0xff]
        %v1116 = vld [vmem:[%s4 + $0x68] sm:$0xff]
        %v1117 = vld [vmem:[%s4 + $0x70] sm:$0xff]
        %v1118 = vld [vmem:[%s4 + $0x78] sm:$0xff]
        %v1119 = vld [vmem:[%s5] sm:$0x1]
        %v1121 = vlaneseq
        %v1122 = vshrl.u32 %v1121, 7
        %v1123 = vsub.s32 0, %v1122
        %v1124 = vrot.slane %v1119, %v1123
        %1126 = vmatprep.subr.mxu0 0.0
        %1127 = vmatpush1.msra.mxu0 %v1118
        %1128 = vmatprep.subr.mxu0 0.0
        %1129 = vmatpush1.msra.mxu0 %v1117
        %1130 = vmatprep.subr.mxu0 0.0
        %1131 = vmatpush1.msra.mxu0 %v1116
        %1132 = vmatprep.subr.mxu0 0.0
        %1133 = vmatpush1.msra.mxu0 %v1115
        %1134 = vmatprep.subr.mxu0 0.0
        %1135 = vmatpush1.msra.mxu0 %v1114
        %1136 = vmatprep.subr.mxu0 0.0
        %1137 = vmatpush1.msra.mxu0 %v1113
        %1138 = vmatprep.subr.mxu0 0.0
        %1139 = vmatpush1.msra.mxu0 %v1112
        %1140 = vmatprep.subr.mxu0 0.0
        %1141 = vmatpush1.msra.mxu0 %v1111
        %1142 = vmatprep.subr.mxu0 0.0
        %1143 = vmatpush1.msra.mxu0 %v1110
        %1144 = vmatprep.subr.mxu0 0.0
        %1145 = vmatpush1.msra.mxu0 %v1109
        %1146 = vmatprep.subr.mxu0 0.0
        %1147 = vmatpush1.msra.mxu0 %v1108
        %1148 = vmatprep.subr.mxu0 0.0
        %1149 = vmatpush1.msra.mxu0 %v1107
        %1150 = vmatprep.subr.mxu0 0.0
        %1151 = vmatpush1.msra.mxu0 %v1106
        %1152 = vmatprep.subr.mxu0 0.0
        %1153 = vmatpush1.msra.mxu0 %v1105
        %1154 = vmatprep.subr.mxu0 0.0
        %1155 = vmatpush1.msra.mxu0 %v1104
        %1156 = vmatprep.subr.mxu0 0.0
        %1157 = vmatpush1.msra.mxu0 %v1103
        %1158 = vmatprep.subr.mxu0 0.0
        %1159 = vmatpush2.msra.mxu0 0.0
        %1160 = vmatprep.subr.mxu0 0.0
        %1161 = vmatpush2.msra.mxu0 0.0
        %1162 = vmatprep.subr.mxu0 0.0
        %1163 = vmatpush2.msra.mxu0 0.0
        %1164 = vmatprep.subr.mxu0 0.0
        %1165 = vmatpush2.msra.mxu0 0.0
        %1166 = vmatprep.subr.mxu0 0.0
        %1167 = vmatpush2.msra.mxu0 0.0
        %1168 = vmatprep.subr.mxu0 0.0
        %1169 = vmatpush2.msra.mxu0 0.0
        %1170 = vmatprep.subr.mxu0 0.0
        %1171 = vmatpush2.msra.mxu0 0.0
        %1172 = vmatprep.subr.mxu0 0.0
        %1173 = vmatpush2.msra.mxu0 0.0
        %1174 = vmatprep.subr.mxu0 0.0
        %1175 = vmatpush2.msra.mxu0 0.0
        %1176 = vmatprep.subr.mxu0 0.0
        %1177 = vmatpush2.msra.mxu0 0.0
        %1178 = vmatprep.subr.mxu0 0.0
        %1179 = vmatpush2.msra.mxu0 0.0
        %1180 = vmatprep.subr.mxu0 0.0
        %1181 = vmatpush2.msra.mxu0 0.0
        %1182 = vmatprep.subr.mxu0 0.0
        %1183 = vmatpush2.msra.mxu0 0.0
        %1184 = vmatprep.subr.mxu0 0.0
        %1185 = vmatpush2.msra.mxu0 0.0
        %1186 = vmatprep.subr.mxu0 0.0
        %1187 = vmatpush2.msra.mxu0 0.0
        %1188 = vmatprep.subr.mxu0 0.0
        %1189 = vmatpush2.msra.mxu0 0.0
        %1190 = vmatprep.mubr.f32.mxu0 0.0
        %1191 = vmatmul.mubr.f32.gmra.mxu0 %v1087
        %v1192 = vpop.f32.mrf.mxu0
        %v1193 = vadd.f32 %v1124, %v1192
        %v1194 = vpop.f32.mrf.mxu0
        %1195 = vmatprep.mubr.f32.mxu0 0.0
        %1196 = vmatmul.mubr.f32.gmra.mxu0 %v1089
        %v1197 = vpop.f32.mrf.mxu0
        %v1198 = vadd.f32 %v1124, %v1197
        %v1199 = vpop.f32.mrf.mxu0
        %1200 = vmatprep.mubr.f32.mxu0 0.0
        %1201 = vmatmul.mubr.f32.gmra.mxu0 %v1091
        %v1202 = vpop.f32.mrf.mxu0
        %v1203 = vadd.f32 %v1124, %v1202
        %v1204 = vpop.f32.mrf.mxu0
        %1205 = vmatprep.mubr.f32.mxu0 0.0
        %1206 = vmatmul.mubr.f32.gmra.mxu0 %v1093
        %v1207 = vpop.f32.mrf.mxu0
        %v1208 = vadd.f32 %v1124, %v1207
        %v1209 = vpop.f32.mrf.mxu0
        %1210 = vmatprep.mubr.f32.mxu0 0.0
        %1211 = vmatmul.mubr.f32.gmra.mxu0 %v1095
        %v1212 = vpop.f32.mrf.mxu0
        %v1213 = vadd.f32 %v1124, %v1212
        %v1214 = vpop.f32.mrf.mxu0
        %1215 = vmatprep.mubr.f32.mxu0 0.0
        %1216 = vmatmul.mubr.f32.gmra.mxu0 %v1097
        %v1217 = vpop.f32.mrf.mxu0
        %v1218 = vadd.f32 %v1124, %v1217
        %v1219 = vpop.f32.mrf.mxu0
        %1220 = vmatprep.mubr.f32.mxu0 0.0
        %1221 = vmatmul.mubr.f32.gmra.mxu0 %v1099
        %v1222 = vpop.f32.mrf.mxu0
        %v1223 = vadd.f32 %v1124, %v1222
        %v1224 = vpop.f32.mrf.mxu0
        %1225 = vmatprep.mubr.f32.mxu0 0.0
        %1226 = vmatmul.mubr.f32.gmra.mxu0 %v1101
        %v1227 = vpop.f32.mrf.mxu0
        %v1228 = vadd.f32 %v1124, %v1227
        %v1229 = vpop.f32.mrf.mxu0
        %1230 = vdwg.mxu0
        %v1231 = vmax.f32 %v1193, 0.0
        %v1232 = vmax.f32 %v1198, 0.0
        %v1233 = vmax.f32 %v1203, 0.0
        %v1234 = vmax.f32 %v1208, 0.0
        %v1235 = vmax.f32 %v1213, 0.0
        %v1236 = vmax.f32 %v1218, 0.0
        %v1237 = vmax.f32 %v1223, 0.0
        %v1238 = vmax.f32 %v1228, 0.0
        %v1239 = vld [vmem:[%s6] sm:$0xff]
        %v1240 = vld [vmem:[%s6 + $0x8] sm:$0xff]
        %v1241 = vld [vmem:[%s6 + $0x10] sm:$0xff]
        %v1242 = vld [vmem:[%s6 + $0x18] sm:$0xff]
        %v1243 = vld [vmem:[%s6 + $0x20] sm:$0xff]
        %v1244 = vld [vmem:[%s6 + $0x28] sm:$0xff]
        %v1245 = vld [vmem:[%s6 + $0x30] sm:$0xff]
        %v1246 = vld [vmem:[%s6 + $0x38] sm:$0xff]
        %v1247 = vld [vmem:[%s6 + $0x40] sm:$0xff]
        %v1248 = vld [vmem:[%s6 + $0x48] sm:$0xff]
        %v1249 = vld [vmem:[%s6 + $0x50] sm:$0xff]
        %v1250 = vld [vmem:[%s6 + $0x58] sm:$0xff]
        %v1251 = vld [vmem:[%s6 + $0x60] sm:$0xff]
        %v1252 = vld [vmem:[%s6 + $0x68] sm:$0xff]
        %v1253 = vld [vmem:[%s6 + $0x70] sm:$0xff]
        %v1254 = vld [vmem:[%s6 + $0x78] sm:$0xff]
        %v1255 = vld [vmem:[%s6 + $0x80] sm:$0xff]
        %v1256 = vld [vmem:[%s6 + $0x88] sm:$0xff]
        %v1257 = vld [vmem:[%s6 + $0x90] sm:$0xff]
        %v1258 = vld [vmem:[%s6 + $0x98] sm:$0xff]
        %v1259 = vld [vmem:[%s6 + $0xa0] sm:$0xff]
        %v1260 = vld [vmem:[%s6 + $0xa8] sm:$0xff]
        %v1261 = vld [vmem:[%s6 + $0xb0] sm:$0xff]
        %v1262 = vld [vmem:[%s6 + $0xb8] sm:$0xff]
        %v1263 = vld [vmem:[%s6 + $0xc0] sm:$0xff]
        %v1264 = vld [vmem:[%s6 + $0xc8] sm:$0xff]
        %v1265 = vld [vmem:[%s6 + $0xd0] sm:$0xff]
        %v1266 = vld [vmem:[%s6 + $0xd8] sm:$0xff]
        %v1267 = vld [vmem:[%s6 + $0xe0] sm:$0xff]
        %v1268 = vld [vmem:[%s6 + $0xe8] sm:$0xff]
        %v1269 = vld [vmem:[%s6 + $0xf0] sm:$0xff]
        %v1270 = vld [vmem:[%s6 + $0xf8] sm:$0xff]
        %v1271 = vld [vmem:[%s7] sm:$0x3]
        %v1273 = vlaneseq
        %v1274 = vshrl.u32 %v1273, 7
        %v1275 = vsub.s32 0, %v1274
        %v1276 = vrot.slane %v1271, %v1275
        %v1277 = vlaneseq
        %v1278 = vshrl.u32 %v1277, 7
        %v1279 = vsub.s32 1, %v1278
        %v1280 = vrot.slane %v1271, %v1279
        %1283 = vmatprep.subr.mxu0 %v1270
        %1284 = vmatpush1.msra.mxu0 %v1269
        %1285 = vmatprep.subr.mxu0 %v1268
        %1286 = vmatpush1.msra.mxu0 %v1267
        %1287 = vmatprep.subr.mxu0 %v1266
        %1288 = vmatpush1.msra.mxu0 %v1265
        %1289 = vmatprep.subr.mxu0 %v1264
        %1290 = vmatpush1.msra.mxu0 %v1263
        %1291 = vmatprep.subr.mxu0 %v1262
        %1292 = vmatpush1.msra.mxu0 %v1261
        %1293 = vmatprep.subr.mxu0 %v1260
        %1294 = vmatpush1.msra.mxu0 %v1259
        %1295 = vmatprep.subr.mxu0 %v1258
        %1296 = vmatpush1.msra.mxu0 %v1257
        %1297 = vmatprep.subr.mxu0 %v1256
        %1298 = vmatpush1.msra.mxu0 %v1255
        %1299 = vmatprep.subr.mxu0 %v1254
        %1300 = vmatpush1.msra.mxu0 %v1253
        %1301 = vmatprep.subr.mxu0 %v1252
        %1302 = vmatpush1.msra.mxu0 %v1251
        %1303 = vmatprep.subr.mxu0 %v1250
        %1304 = vmatpush1.msra.mxu0 %v1249
        %1305 = vmatprep.subr.mxu0 %v1248
        %1306 = vmatpush1.msra.mxu0 %v1247
        %1307 = vmatprep.subr.mxu0 %v1246
        %1308 = vmatpush1.msra.mxu0 %v1245
        %1309 = vmatprep.subr.mxu0 %v1244
        %1310 = vmatpush1.msra.mxu0 %v1243
        %1311 = vmatprep.subr.mxu0 %v1242
        %1312 = vmatpush1.msra.mxu0 %v1241
        %1313 = vmatprep.subr.mxu0 %v1240
        %1314 = vmatpush1.msra.mxu0 %v1239
        %1315 = vmatprep.subr.mxu0 0.0
        %1316 = vmatpush2.msra.mxu0 0.0
        %1317 = vmatprep.subr.mxu0 0.0
        %1318 = vmatpush2.msra.mxu0 0.0
        %1319 = vmatprep.subr.mxu0 0.0
        %1320 = vmatpush2.msra.mxu0 0.0
        %1321 = vmatprep.subr.mxu0 0.0
        %1322 = vmatpush2.msra.mxu0 0.0
        %1323 = vmatprep.subr.mxu0 0.0
        %1324 = vmatpush2.msra.mxu0 0.0
        %1325 = vmatprep.subr.mxu0 0.0
        %1326 = vmatpush2.msra.mxu0 0.0
        %1327 = vmatprep.subr.mxu0 0.0
        %1328 = vmatpush2.msra.mxu0 0.0
        %1329 = vmatprep.subr.mxu0 0.0
        %1330 = vmatpush2.msra.mxu0 0.0
        %1331 = vmatprep.subr.mxu0 0.0
        %1332 = vmatpush2.msra.mxu0 0.0
        %1333 = vmatprep.subr.mxu0 0.0
        %1334 = vmatpush2.msra.mxu0 0.0
        %1335 = vmatprep.subr.mxu0 0.0
        %1336 = vmatpush2.msra.mxu0 0.0
        %1337 = vmatprep.subr.mxu0 0.0
        %1338 = vmatpush2.msra.mxu0 0.0
        %1339 = vmatprep.subr.mxu0 0.0
        %1340 = vmatpush2.msra.mxu0 0.0
        %1341 = vmatprep.subr.mxu0 0.0
        %1342 = vmatpush2.msra.mxu0 0.0
        %1343 = vmatprep.subr.mxu0 0.0
        %1344 = vmatpush2.msra.mxu0 0.0
        %1345 = vmatprep.subr.mxu0 0.0
        %1346 = vmatpush2.msra.mxu0 0.0
        %1347 = vmatprep.mubr.f32.mxu0 0.0
        %1348 = vmatmul.mubr.f32.gmra.mxu0 %v1231
        %v1349 = vpop.f32.mrf.mxu0
        %v1350 = vadd.f32 %v1276, %v1349
        %v1351 = vpop.f32.mrf.mxu0
        %v1352 = vadd.f32 %v1280, %v1351
        %1353 = vmatprep.mubr.f32.mxu0 0.0
        %1354 = vmatmul.mubr.f32.gmra.mxu0 %v1232
        %v1355 = vpop.f32.mrf.mxu0
        %v1356 = vadd.f32 %v1276, %v1355
        %v1357 = vpop.f32.mrf.mxu0
        %v1358 = vadd.f32 %v1280, %v1357
        %1359 = vmatprep.mubr.f32.mxu0 0.0
        %1360 = vmatmul.mubr.f32.gmra.mxu0 %v1233
        %v1361 = vpop.f32.mrf.mxu0
        %v1362 = vadd.f32 %v1276, %v1361
        %v1363 = vpop.f32.mrf.mxu0
        %v1364 = vadd.f32 %v1280, %v1363
        %1365 = vmatprep.mubr.f32.mxu0 0.0
        %1366 = vmatmul.mubr.f32.gmra.mxu0 %v1234
        %v1367 = vpop.f32.mrf.mxu0
        %v1368 = vadd.f32 %v1276, %v1367
        %v1369 = vpop.f32.mrf.mxu0
        %v1370 = vadd.f32 %v1280, %v1369
        %1371 = vmatprep.mubr.f32.mxu0 0.0
        %1372 = vmatmul.mubr.f32.gmra.mxu0 %v1235
        %v1373 = vpop.f32.mrf.mxu0
        %v1374 = vadd.f32 %v1276, %v1373
        %v1375 = vpop.f32.mrf.mxu0
        %v1376 = vadd.f32 %v1280, %v1375
        %1377 = vmatprep.mubr.f32.mxu0 0.0
        %1378 = vmatmul.mubr.f32.gmra.mxu0 %v1236
        %v1379 = vpop.f32.mrf.mxu0
        %v1380 = vadd.f32 %v1276, %v1379
        %v1381 = vpop.f32.mrf.mxu0
        %v1382 = vadd.f32 %v1280, %v1381
        %1383 = vmatprep.mubr.f32.mxu0 0.0
        %1384 = vmatmul.mubr.f32.gmra.mxu0 %v1237
        %v1385 = vpop.f32.mrf.mxu0
        %v1386 = vadd.f32 %v1276, %v1385
        %v1387 = vpop.f32.mrf.mxu0
        %v1388 = vadd.f32 %v1280, %v1387
        %1389 = vmatprep.mubr.f32.mxu0 0.0
        %1390 = vmatmul.mubr.f32.gmra.mxu0 %v1238
        %v1391 = vpop.f32.mrf.mxu0
        %v1392 = vadd.f32 %v1276, %v1391
        %v1393 = vpop.f32.mrf.mxu0
        %v1394 = vadd.f32 %v1280, %v1393
        %1395 = vdwg.mxu0
        %v1396 = vxor.u32 %v1350, 2147483648
        %v1397 = vxor.u32 %v1352, 2147483648
        %v1398 = vxor.u32 %v1356, 2147483648
        %v1399 = vxor.u32 %v1358, 2147483648
        %v1400 = vxor.u32 %v1362, 2147483648
        %v1401 = vxor.u32 %v1364, 2147483648
        %v1402 = vxor.u32 %v1368, 2147483648
        %v1403 = vxor.u32 %v1370, 2147483648
        %v1404 = vxor.u32 %v1374, 2147483648
        %v1405 = vxor.u32 %v1376, 2147483648
        %v1406 = vxor.u32 %v1380, 2147483648
        %v1407 = vxor.u32 %v1382, 2147483648
        %v1408 = vxor.u32 %v1386, 2147483648
        %v1409 = vxor.u32 %v1388, 2147483648
        %v1410 = vxor.u32 %v1392, 2147483648
        %v1411 = vxor.u32 %v1394, 2147483648
        %v1412 = vmul.f32 %v1396, 1.442695
        %v1413 = vpow.pop %v1412
        %v1414 = vmul.f32 %v1397, 1.442695
        %v1415 = vpow.pop %v1414
        %v1416 = vmul.f32 %v1398, 1.442695
        %v1417 = vpow.pop %v1416
        %v1418 = vmul.f32 %v1399, 1.442695
        %v1419 = vpow.pop %v1418
        %v1420 = vmul.f32 %v1400, 1.442695
        %v1421 = vpow.pop %v1420
        %v1422 = vmul.f32 %v1401, 1.442695
        %v1423 = vpow.pop %v1422
        %v1424 = vmul.f32 %v1402, 1.442695
        %v1425 = vpow.pop %v1424
        %v1426 = vmul.f32 %v1403, 1.442695
        %v1427 = vpow.pop %v1426
        %v1428 = vmul.f32 %v1404, 1.442695
        %v1429 = vpow.pop %v1428
        %v1430 = vmul.f32 %v1405, 1.442695
        %v1431 = vpow.pop %v1430
        %v1432 = vmul.f32 %v1406, 1.442695
        %v1433 = vpow.pop %v1432
        %v1434 = vmul.f32 %v1407, 1.442695
        %v1435 = vpow.pop %v1434
        %v1436 = vmul.f32 %v1408, 1.442695
        %v1437 = vpow.pop %v1436
        %v1438 = vmul.f32 %v1409, 1.442695
        %v1439 = vpow.pop %v1438
        %v1440 = vmul.f32 %v1410, 1.442695
        %v1441 = vpow.pop %v1440
        %v1442 = vmul.f32 %v1411, 1.442695
        %v1443 = vpow.pop %v1442
        %v1444 = vadd.f32 %v1413, 1.0
        %v1445 = vadd.f32 %v1415, 1.0
        %v1446 = vadd.f32 %v1417, 1.0
        %v1447 = vadd.f32 %v1419, 1.0
        %v1448 = vadd.f32 %v1421, 1.0
        %v1449 = vadd.f32 %v1423, 1.0
        %v1450 = vadd.f32 %v1425, 1.0
        %v1451 = vadd.f32 %v1427, 1.0
        %v1452 = vadd.f32 %v1429, 1.0
        %v1453 = vadd.f32 %v1431, 1.0
        %v1454 = vadd.f32 %v1433, 1.0
        %v1455 = vadd.f32 %v1435, 1.0
        %v1456 = vadd.f32 %v1437, 1.0
        %v1457 = vadd.f32 %v1439, 1.0
        %v1458 = vadd.f32 %v1441, 1.0
        %v1459 = vadd.f32 %v1443, 1.0
        %v1460 = vrcp.pop %v1444
        %v1461 = vmul.f32 1.0, %v1460
        %v1462 = vrcp.pop %v1445
        %v1463 = vmul.f32 1.0, %v1462
        %v1464 = vrcp.pop %v1446
        %v1465 = vmul.f32 1.0, %v1464
        %v1466 = vrcp.pop %v1447
        %v1467 = vmul.f32 1.0, %v1466
        %v1468 = vrcp.pop %v1448
        %v1469 = vmul.f32 1.0, %v1468
        %v1470 = vrcp.pop %v1449
        %v1471 = vmul.f32 1.0, %v1470
        %v1472 = vrcp.pop %v1450
        %v1473 = vmul.f32 1.0, %v1472
        %v1474 = vrcp.pop %v1451
        %v1475 = vmul.f32 1.0, %v1474
        %v1476 = vrcp.pop %v1452
        %v1477 = vmul.f32 1.0, %v1476
        %v1478 = vrcp.pop %v1453
        %v1479 = vmul.f32 1.0, %v1478
        %v1480 = vrcp.pop %v1454
        %v1481 = vmul.f32 1.0, %v1480
        %v1482 = vrcp.pop %v1455
        %v1483 = vmul.f32 1.0, %v1482
        %v1484 = vrcp.pop %v1456
        %v1485 = vmul.f32 1.0, %v1484
        %v1486 = vrcp.pop %v1457
        %v1487 = vmul.f32 1.0, %v1486
        %v1488 = vrcp.pop %v1458
        %v1489 = vmul.f32 1.0, %v1488
        %v1490 = vrcp.pop %v1459
        %v1491 = vmul.f32 1.0, %v1490
        %v1492 = vmul.f32 %v1088, %v1461
        %v1493 = vmul.f32 %v1090, %v1465
        %v1494 = vmul.f32 %v1092, %v1469
        %v1495 = vmul.f32 %v1094, %v1473
        %v1496 = vmul.f32 %v1096, %v1477
        %v1497 = vmul.f32 %v1098, %v1481
        %v1498 = vmul.f32 %v1100, %v1485
        %v1499 = vmul.f32 %v1102, %v1489
        %v1500 = vld [vmem:[%s8] sm:$0xff]
        %v1501 = vld [vmem:[%s8 + $0x8] sm:$0xff]
        %v1502 = vld [vmem:[%s8 + $0x10] sm:$0xff]
        %v1503 = vld [vmem:[%s8 + $0x18] sm:$0xff]
        %v1504 = vld [vmem:[%s8 + $0x20] sm:$0xff]
        %v1505 = vld [vmem:[%s8 + $0x28] sm:$0xff]
        %v1506 = vld [vmem:[%s8 + $0x30] sm:$0xff]
        %v1507 = vld [vmem:[%s8 + $0x38] sm:$0xff]
        %v1508 = vld [vmem:[%s8 + $0x40] sm:$0xff]
        %v1509 = vld [vmem:[%s8 + $0x48] sm:$0xff]
        %v1510 = vld [vmem:[%s8 + $0x50] sm:$0xff]
        %v1511 = vld [vmem:[%s8 + $0x58] sm:$0xff]
        %v1512 = vld [vmem:[%s8 + $0x60] sm:$0xff]
        %v1513 = vld [vmem:[%s8 + $0x68] sm:$0xff]
        %v1514 = vld [vmem:[%s8 + $0x70] sm:$0xff]
        %v1515 = vld [vmem:[%s8 + $0x78] sm:$0xff]
        %1516 = vmatprep.subr.mxu0 0.0
        %1517 = vmatpush1.msra.mxu0 %v1515
        %1518 = vmatprep.subr.mxu0 0.0
        %1519 = vmatpush1.msra.mxu0 %v1514
        %1520 = vmatprep.subr.mxu0 0.0
        %1521 = vmatpush1.msra.mxu0 %v1513
        %1522 = vmatprep.subr.mxu0 0.0
        %1523 = vmatpush1.msra.mxu0 %v1512
        %1524 = vmatprep.subr.mxu0 0.0
        %1525 = vmatpush1.msra.mxu0 %v1511
        %1526 = vmatprep.subr.mxu0 0.0
        %1527 = vmatpush1.msra.mxu0 %v1510
        %1528 = vmatprep.subr.mxu0 0.0
        %1529 = vmatpush1.msra.mxu0 %v1509
        %1530 = vmatprep.subr.mxu0 0.0
        %1531 = vmatpush1.msra.mxu0 %v1508
        %1532 = vmatprep.subr.mxu0 0.0
        %1533 = vmatpush1.msra.mxu0 %v1507
        %1534 = vmatprep.subr.mxu0 0.0
        %1535 = vmatpush1.msra.mxu0 %v1506
        %1536 = vmatprep.subr.mxu0 0.0
        %1537 = vmatpush1.msra.mxu0 %v1505
        %1538 = vmatprep.subr.mxu0 0.0
        %1539 = vmatpush1.msra.mxu0 %v1504
        %1540 = vmatprep.subr.mxu0 0.0
        %1541 = vmatpush1.msra.mxu0 %v1503
        %1542 = vmatprep.subr.mxu0 0.0
        %1543 = vmatpush1.msra.mxu0 %v1502
        %1544 = vmatprep.subr.mxu0 0.0
        %1545 = vmatpush1.msra.mxu0 %v1501
        %1546 = vmatprep.subr.mxu0 0.0
        %1547 = vmatpush1.msra.mxu0 %v1500
        %1548 = vmatprep.subr.mxu0 0.0
        %1549 = vmatpush2.msra.mxu0 0.0
        %1550 = vmatprep.subr.mxu0 0.0
        %1551 = vmatpush2.msra.mxu0 0.0
        %1552 = vmatprep.subr.mxu0 0.0
        %1553 = vmatpush2.msra.mxu0 0.0
        %1554 = vmatprep.subr.mxu0 0.0
        %1555 = vmatpush2.msra.mxu0 0.0
        %1556 = vmatprep.subr.mxu0 0.0
        %1557 = vmatpush2.msra.mxu0 0.0
        %1558 = vmatprep.subr.mxu0 0.0
        %1559 = vmatpush2.msra.mxu0 0.0
        %1560 = vmatprep.subr.mxu0 0.0
        %1561 = vmatpush2.msra.mxu0 0.0
        %1562 = vmatprep.subr.mxu0 0.0
        %1563 = vmatpush2.msra.mxu0 0.0
        %1564 = vmatprep.subr.mxu0 0.0
        %1565 = vmatpush2.msra.mxu0 0.0
        %1566 = vmatprep.subr.mxu0 0.0
        %1567 = vmatpush2.msra.mxu0 0.0
        %1568 = vmatprep.subr.mxu0 0.0
        %1569 = vmatpush2.msra.mxu0 0.0
        %1570 = vmatprep.subr.mxu0 0.0
        %1571 = vmatpush2.msra.mxu0 0.0
        %1572 = vmatprep.subr.mxu0 0.0
        %1573 = vmatpush2.msra.mxu0 0.0
        %1574 = vmatprep.subr.mxu0 0.0
        %1575 = vmatpush2.msra.mxu0 0.0
        %1576 = vmatprep.subr.mxu0 0.0
        %1577 = vmatpush2.msra.mxu0 0.0
        %1578 = vmatprep.subr.mxu0 0.0
        %1579 = vmatpush2.msra.mxu0 0.0
        %1580 = vmatprep.mubr.f32.mxu0 0.0
        %1581 = vmatmul.mubr.f32.gmra.mxu0 %v1492
        %v1582 = vpop.f32.mrf.mxu0
        %v1583 = vadd.f32 0.0, %v1582
        %v1584 = vpop.f32.mrf.mxu0
        %1585 = vmatprep.mubr.f32.mxu0 0.0
        %1586 = vmatmul.mubr.f32.gmra.mxu0 %v1493
        %v1587 = vpop.f32.mrf.mxu0
        %v1588 = vadd.f32 0.0, %v1587
        %v1589 = vpop.f32.mrf.mxu0
        %1590 = vmatprep.mubr.f32.mxu0 0.0
        %1591 = vmatmul.mubr.f32.gmra.mxu0 %v1494
        %v1592 = vpop.f32.mrf.mxu0
        %v1593 = vadd.f32 0.0, %v1592
        %v1594 = vpop.f32.mrf.mxu0
        %1595 = vmatprep.mubr.f32.mxu0 0.0
        %1596 = vmatmul.mubr.f32.gmra.mxu0 %v1495
        %v1597 = vpop.f32.mrf.mxu0
        %v1598 = vadd.f32 0.0, %v1597
        %v1599 = vpop.f32.mrf.mxu0
        %1600 = vmatprep.mubr.f32.mxu0 0.0
        %1601 = vmatmul.mubr.f32.gmra.mxu0 %v1496
        %v1602 = vpop.f32.mrf.mxu0
        %v1603 = vadd.f32 0.0, %v1602
        %v1604 = vpop.f32.mrf.mxu0
        %1605 = vmatprep.mubr.f32.mxu0 0.0
        %1606 = vmatmul.mubr.f32.gmra.mxu0 %v1497
        %v1607 = vpop.f32.mrf.mxu0
        %v1608 = vadd.f32 0.0, %v1607
        %v1609 = vpop.f32.mrf.mxu0
        %1610 = vmatprep.mubr.f32.mxu0 0.0
        %1611 = vmatmul.mubr.f32.gmra.mxu0 %v1498
        %v1612 = vpop.f32.mrf.mxu0
        %v1613 = vadd.f32 0.0, %v1612
        %v1614 = vpop.f32.mrf.mxu0
        %1615 = vmatprep.mubr.f32.mxu0 0.0
        %1616 = vmatmul.mubr.f32.gmra.mxu0 %v1499
        %v1617 = vpop.f32.mrf.mxu0
        %v1618 = vadd.f32 0.0, %v1617
        %v1619 = vpop.f32.mrf.mxu0
        %1620 = vdwg.mxu0
        %v1621 = vstv %s386
        %v1622 = vmul.f32 %v1583, %v1621
        %v1623 = vmul.f32 %v1588, %v1621
        %v1624 = vmul.f32 %v1593, %v1621
        %v1625 = vmul.f32 %v1598, %v1621
        %v1626 = vmul.f32 %v1603, %v1621
        %v1627 = vmul.f32 %v1608, %v1621
        %v1628 = vmul.f32 %v1613, %v1621
        %v1629 = vmul.f32 %v1618, %v1621
        %1630 = vst.msk [vmem:[%s384] sm:$0xff] %vm434, %v1622
        %1631 = vst.msk [vmem:[%s384 + $0x8] sm:$0xff] %vm434, %v1623
        %1632 = vst.msk [vmem:[%s384 + $0x10] sm:$0xff] %vm434, %v1624
        %1633 = vst.msk [vmem:[%s384 + $0x18] sm:$0xff] %vm434, %v1625
        %1634 = vst.msk [vmem:[%s384 + $0x20] sm:$0xff] %vm434, %v1626
        %1635 = vst.msk [vmem:[%s384 + $0x28] sm:$0xff] %vm434, %v1627
        %1636 = vst.msk [vmem:[%s384 + $0x30] sm:$0xff] %vm434, %v1628
        %1637 = vst.msk [vmem:[%s384 + $0x38] sm:$0xff] %vm434, %v1629
        %v1638 = vmul.f32 %v1088, %v1463
        %v1639 = vmul.f32 %v1090, %v1467
        %v1640 = vmul.f32 %v1092, %v1471
        %v1641 = vmul.f32 %v1094, %v1475
        %v1642 = vmul.f32 %v1096, %v1479
        %v1643 = vmul.f32 %v1098, %v1483
        %v1644 = vmul.f32 %v1100, %v1487
        %v1645 = vmul.f32 %v1102, %v1491
        %v1646 = vld [vmem:[%s8] sm:$0xff]
        %v1647 = vld [vmem:[%s8 + $0x8] sm:$0xff]
        %v1648 = vld [vmem:[%s8 + $0x10] sm:$0xff]
        %v1649 = vld [vmem:[%s8 + $0x18] sm:$0xff]
        %v1650 = vld [vmem:[%s8 + $0x20] sm:$0xff]
        %v1651 = vld [vmem:[%s8 + $0x28] sm:$0xff]
        %v1652 = vld [vmem:[%s8 + $0x30] sm:$0xff]
        %v1653 = vld [vmem:[%s8 + $0x38] sm:$0xff]
        %v1654 = vld [vmem:[%s8 + $0x40] sm:$0xff]
        %v1655 = vld [vmem:[%s8 + $0x48] sm:$0xff]
        %v1656 = vld [vmem:[%s8 + $0x50] sm:$0xff]
        %v1657 = vld [vmem:[%s8 + $0x58] sm:$0xff]
        %v1658 = vld [vmem:[%s8 + $0x60] sm:$0xff]
        %v1659 = vld [vmem:[%s8 + $0x68] sm:$0xff]
        %v1660 = vld [vmem:[%s8 + $0x70] sm:$0xff]
        %v1661 = vld [vmem:[%s8 + $0x78] sm:$0xff]
        %1662 = vmatprep.subr.mxu0 0.0
        %1663 = vmatpush1.msra.mxu0 %v1661
        %1664 = vmatprep.subr.mxu0 0.0
        %1665 = vmatpush1.msra.mxu0 %v1660
        %1666 = vmatprep.subr.mxu0 0.0
        %1667 = vmatpush1.msra.mxu0 %v1659
        %1668 = vmatprep.subr.mxu0 0.0
        %1669 = vmatpush1.msra.mxu0 %v1658
        %1670 = vmatprep.subr.mxu0 0.0
        %1671 = vmatpush1.msra.mxu0 %v1657
        %1672 = vmatprep.subr.mxu0 0.0
        %1673 = vmatpush1.msra.mxu0 %v1656
        %1674 = vmatprep.subr.mxu0 0.0
        %1675 = vmatpush1.msra.mxu0 %v1655
        %1676 = vmatprep.subr.mxu0 0.0
        %1677 = vmatpush1.msra.mxu0 %v1654
        %1678 = vmatprep.subr.mxu0 0.0
        %1679 = vmatpush1.msra.mxu0 %v1653
        %1680 = vmatprep.subr.mxu0 0.0
        %1681 = vmatpush1.msra.mxu0 %v1652
        %1682 = vmatprep.subr.mxu0 0.0
        %1683 = vmatpush1.msra.mxu0 %v1651
        %1684 = vmatprep.subr.mxu0 0.0
        %1685 = vmatpush1.msra.mxu0 %v1650
        %1686 = vmatprep.subr.mxu0 0.0
        %1687 = vmatpush1.msra.mxu0 %v1649
        %1688 = vmatprep.subr.mxu0 0.0
        %1689 = vmatpush1.msra.mxu0 %v1648
        %1690 = vmatprep.subr.mxu0 0.0
        %1691 = vmatpush1.msra.mxu0 %v1647
        %1692 = vmatprep.subr.mxu0 0.0
        %1693 = vmatpush1.msra.mxu0 %v1646
        %1694 = vmatprep.subr.mxu0 0.0
        %1695 = vmatpush2.msra.mxu0 0.0
        %1696 = vmatprep.subr.mxu0 0.0
        %1697 = vmatpush2.msra.mxu0 0.0
        %1698 = vmatprep.subr.mxu0 0.0
        %1699 = vmatpush2.msra.mxu0 0.0
        %1700 = vmatprep.subr.mxu0 0.0
        %1701 = vmatpush2.msra.mxu0 0.0
        %1702 = vmatprep.subr.mxu0 0.0
        %1703 = vmatpush2.msra.mxu0 0.0
        %1704 = vmatprep.subr.mxu0 0.0
        %1705 = vmatpush2.msra.mxu0 0.0
        %1706 = vmatprep.subr.mxu0 0.0
        %1707 = vmatpush2.msra.mxu0 0.0
        %1708 = vmatprep.subr.mxu0 0.0
        %1709 = vmatpush2.msra.mxu0 0.0
        %1710 = vmatprep.subr.mxu0 0.0
        %1711 = vmatpush2.msra.mxu0 0.0
        %1712 = vmatprep.subr.mxu0 0.0
        %1713 = vmatpush2.msra.mxu0 0.0
        %1714 = vmatprep.subr.mxu0 0.0
        %1715 = vmatpush2.msra.mxu0 0.0
        %1716 = vmatprep.subr.mxu0 0.0
        %1717 = vmatpush2.msra.mxu0 0.0
        %1718 = vmatprep.subr.mxu0 0.0
        %1719 = vmatpush2.msra.mxu0 0.0
        %1720 = vmatprep.subr.mxu0 0.0
        %1721 = vmatpush2.msra.mxu0 0.0
        %1722 = vmatprep.subr.mxu0 0.0
        %1723 = vmatpush2.msra.mxu0 0.0
        %1724 = vmatprep.subr.mxu0 0.0
        %1725 = vmatpush2.msra.mxu0 0.0
        %1726 = vmatprep.mubr.f32.mxu0 0.0
        %1727 = vmatmul.mubr.f32.gmra.mxu0 %v1638
        %v1728 = vpop.f32.mrf.mxu0
        %v1729 = vadd.f32 0.0, %v1728
        %v1730 = vpop.f32.mrf.mxu0
        %1731 = vmatprep.mubr.f32.mxu0 0.0
        %1732 = vmatmul.mubr.f32.gmra.mxu0 %v1639
        %v1733 = vpop.f32.mrf.mxu0
        %v1734 = vadd.f32 0.0, %v1733
        %v1735 = vpop.f32.mrf.mxu0
        %1736 = vmatprep.mubr.f32.mxu0 0.0
        %1737 = vmatmul.mubr.f32.gmra.mxu0 %v1640
        %v1738 = vpop.f32.mrf.mxu0
        %v1739 = vadd.f32 0.0, %v1738
        %v1740 = vpop.f32.mrf.mxu0
        %1741 = vmatprep.mubr.f32.mxu0 0.0
        %1742 = vmatmul.mubr.f32.gmra.mxu0 %v1641
        %v1743 = vpop.f32.mrf.mxu0
        %v1744 = vadd.f32 0.0, %v1743
        %v1745 = vpop.f32.mrf.mxu0
        %1746 = vmatprep.mubr.f32.mxu0 0.0
        %1747 = vmatmul.mubr.f32.gmra.mxu0 %v1642
        %v1748 = vpop.f32.mrf.mxu0
        %v1749 = vadd.f32 0.0, %v1748
        %v1750 = vpop.f32.mrf.mxu0
        %1751 = vmatprep.mubr.f32.mxu0 0.0
        %1752 = vmatmul.mubr.f32.gmra.mxu0 %v1643
        %v1753 = vpop.f32.mrf.mxu0
        %v1754 = vadd.f32 0.0, %v1753
        %v1755 = vpop.f32.mrf.mxu0
        %1756 = vmatprep.mubr.f32.mxu0 0.0
        %1757 = vmatmul.mubr.f32.gmra.mxu0 %v1644
        %v1758 = vpop.f32.mrf.mxu0
        %v1759 = vadd.f32 0.0, %v1758
        %v1760 = vpop.f32.mrf.mxu0
        %1761 = vmatprep.mubr.f32.mxu0 0.0
        %1762 = vmatmul.mubr.f32.gmra.mxu0 %v1645
        %v1763 = vpop.f32.mrf.mxu0
        %v1764 = vadd.f32 0.0, %v1763
        %v1765 = vpop.f32.mrf.mxu0
        %1766 = vdwg.mxu0
        %v1767 = vmul.f32 %v1729, %v1621
        %v1768 = vmul.f32 %v1734, %v1621
        %v1769 = vmul.f32 %v1739, %v1621
        %v1770 = vmul.f32 %v1744, %v1621
        %v1771 = vmul.f32 %v1749, %v1621
        %v1772 = vmul.f32 %v1754, %v1621
        %v1773 = vmul.f32 %v1759, %v1621
        %v1774 = vmul.f32 %v1764, %v1621
        %s1775 = scalar_lea.vmem %s384, 64
        %1776 = vst.msk [vmem:[%s1775] sm:$0xff] %vm434, %v1767
        %1777 = vst.msk [vmem:[%s1775 + $0x8] sm:$0xff] %vm434, %v1768
        %1778 = vst.msk [vmem:[%s1775 + $0x10] sm:$0xff] %vm434, %v1769
        %1779 = vst.msk [vmem:[%s1775 + $0x18] sm:$0xff] %vm434, %v1770
        %1780 = vst.msk [vmem:[%s1775 + $0x20] sm:$0xff] %vm434, %v1771
        %1781 = vst.msk [vmem:[%s1775 + $0x28] sm:$0xff] %vm434, %v1772
        %1782 = vst.msk [vmem:[%s1775 + $0x30] sm:$0xff] %vm434, %v1773
        %1783 = vst.msk [vmem:[%s1775 + $0x38] sm:$0xff] %vm434, %v1774
        %s1784 = smul.u32 8, %s26
        %p1785 = scmp.lt.s32.totalorder %s25, 1
        %s1786 = scalar_select %p1785, %s25, 1
        %p1787 = scmp.lt.s32.totalorder %s1784, 7
        %s1788 = scalar_select %p1787, %s1784, 7
        %s1789 = smul.addr %s1786, 16
        %s1790 = sadd.s32 %s1788, %s1789
        %s1791 = smul.addr %s1790, 8
        %s1792 = scalar_lea.vmem %s9, %s1791
        // Predicated region
        $region61: #{tpu_custom_call.1} parent=55 // pred_check
          %p1793 = pneg %p249
        $region62: #{tpu_custom_call.1} parent=55 // pred_check_branch
          %1795 = sbr.rel (%p1793) target = $region64
        $region63: #{tpu_custom_call.1} parent=55 // pred_region
          %s1796 = smul.u32 8, %s26
        $region64: #{tpu_custom_call.1} parent=55 // pred_fallthru
          _
      $region56: #{tpu_custom_call.1} parent=5 // pred_fallthru
        _
      %p1797 = scmp.le.s32.totalorder 2, %s16
      // Predicated region
      $region65: #{tpu_custom_call.1} parent=5 // pred_check
        %p1798 = pneg %p1797
      $region66: #{tpu_custom_call.1} parent=5 // pred_check_branch
        %1800 = sbr.rel (%p1798) target = $region68
      $region67: #{tpu_custom_call.1} parent=5 // pred_region
        %s1801 = ssub.s32 %s16, 2
        // Predicated region
        $region69: #{tpu_custom_call.1} parent=67 // pred_check
          %p1802 = pneg %p255
        $region70: #{tpu_custom_call.1} parent=67 // pred_check_branch
          %1804 = sbr.rel (%p1802) target = $region72
        $region71: #{tpu_custom_call.1} parent=67 // pred_region
          %s1805 = smul.u32 8, %s28
          %p1806 = scmp.lt.s32.totalorder %s27, 1
          %s1807 = scalar_select %p1806, %s27, 1
          %p1808 = scmp.lt.s32.totalorder %s1805, 7
          %s1809 = scalar_select %p1808, %s1805, 7
          %s1810 = smul.addr %s1807, 16
          %s1811 = sadd.s32 %s1809, %s1810
          %s1812 = smul.addr %s1811, 8
          %s1813 = scalar_lea.vmem %s9, %s1812
        $region72: #{tpu_custom_call.1} parent=67 // pred_fallthru
          _
      $region68: #{tpu_custom_call.1} parent=5 // pred_fallthru
        _
    $region6: #{tpu_custom_call.1} parent=1 // loop_footer
      %s20 = sadd.s32 1, %s16
    $region7: #{tpu_custom_call.1} parent=1 // loop_footer_branch
      %15 = sbr.rel target = $region3
    $region8: #{tpu_custom_call.1} parent=1 // loop_exit
      _
    %1814 = vsyncpa [#allocation3], 1
    %s1815 = scalar_lea.sflag [#allocation3], 1
    %1816 = vsyncpa %s1815, 1

</llo_original>
